<compile_context>
chip_gen: v5e
topology: v5e:2x2
jax: 0.10.0
libtpu: 0.0.40
codegen_flags: <defaults>
</compile_context>

<pallas_src>
import functools

import jax
import jax.numpy as jnp
from jax.experimental import pallas as pl
from jax.experimental.pallas import tpu as pltpu

STATE_DIM = 24      # environment_dim (20) + robot_dim (4)
ACTION_DIM = 2
H1 = 800
H2 = 600
OUT_PAD = 128       # lane-dense padded output width (>= ACTION_DIM, multiple of 128)


def _round_up(x, m):
    return ((x + m - 1) // m) * m


def actor_kernel(s_ref, w1_ref, b1_ref, w2_ref, b2_ref, w3_ref, b3_ref, o_ref):
    # MXU consumes bf16 operands; accumulation is f32 (preferred_element_type).
    s = s_ref[...].astype(jnp.bfloat16)

    # layer 1: (TB, 24) @ (24, 800) + (1, 800) -> ReLU   (f32 activations)
    h1 = jnp.dot(s, w1_ref[...], preferred_element_type=jnp.float32)
    h1 = jnp.maximum(h1 + b1_ref[...], 0.0)

    # layer 2: (TB, 800) @ (800, 600) + (1, 600) -> ReLU
    h2 = jnp.dot(h1.astype(jnp.bfloat16), w2_ref[...],
                 preferred_element_type=jnp.float32)
    h2 = jnp.maximum(h2 + b2_ref[...], 0.0)

    # layer 3: (TB, 600) @ (600, 128-padded) + (1, 128) -> tanh
    a = jnp.dot(h2.astype(jnp.bfloat16), w3_ref[...],
                preferred_element_type=jnp.float32)
    o_ref[...] = jnp.tanh(a + b3_ref[...]).astype(o_ref.dtype)


def prepare_params(params):
    """Cast weights to bf16 and zero-pad layer-3 to a lane-dense (128) output.

    Do this once (outside the per-step forward) so the per-call HBM traffic is
    the ~1.15 MB of bf16 weights instead of ~2 MB of f32.
    """
    w1, b1, w2, b2, w3, b3 = params
    w3p = jnp.zeros((H2, OUT_PAD), jnp.float32).at[:, :ACTION_DIM].set(w3)
    b3p = jnp.zeros((1, OUT_PAD), jnp.float32).at[:, :ACTION_DIM].set(b3)
    return (
        w1.astype(jnp.bfloat16), b1.astype(jnp.float32),
        w2.astype(jnp.bfloat16), b2.astype(jnp.float32),
        w3p.astype(jnp.bfloat16), b3p.astype(jnp.float32),
    )


@functools.partial(jax.jit, static_argnames=("tb",))
def actor_forward(s, prepared_params, *, tb=256):
    """s: (B, 24) float32 -> actions (B, 2) float32."""
    w1, b1, w2, b2, w3p, b3p = prepared_params
    B = s.shape[0]

    # Batch tile: cap at `tb`, keep sublane-aligned (multiple of 8) for small B.
    TB = min(tb, _round_up(B, 8))
    Bp = _round_up(B, TB)
    if Bp != B:
        s = jnp.pad(s, ((0, Bp - B), (0, 0)))

    grid = (Bp // TB,)

    out = pl.pallas_call(
        actor_kernel,
        out_shape=jax.ShapeDtypeStruct((Bp, OUT_PAD), jnp.float32),
        grid=grid,
        in_specs=[
            # state: tiled over the batch grid axis
            pl.BlockSpec((TB, STATE_DIM), lambda i: (i, 0)),
            # weights / biases: constant block index -> stay VMEM-resident across steps
            pl.BlockSpec((STATE_DIM, H1), lambda i: (0, 0)),
            pl.BlockSpec((1, H1), lambda i: (0, 0)),
            pl.BlockSpec((H1, H2), lambda i: (0, 0)),
            pl.BlockSpec((1, H2), lambda i: (0, 0)),
            pl.BlockSpec((H2, OUT_PAD), lambda i: (0, 0)),
            pl.BlockSpec((1, OUT_PAD), lambda i: (0, 0)),
        ],
        out_specs=pl.BlockSpec((TB, OUT_PAD), lambda i: (i, 0)),
        compiler_params=pltpu.CompilerParams(
            dimension_semantics=("parallel",),  # batch axis: megacore-shardable
        ),
    )(s, w1, b1, w2, b2, w3p, b3p)

    # Strip batch padding and the lane padding of the action dim.
    return out[:B, :ACTION_DIM]


def init_params(key):
    """Deterministic init mimicking nn.Linear default (uniform +/- 1/sqrt(fan_in))."""
    ks = jax.random.split(key, 6)

    def lin(kw, kb, fan_in, fan_out):
        bound = 1.0 / jnp.sqrt(jnp.float32(fan_in))
        w = jax.random.uniform(kw, (fan_in, fan_out), jnp.float32, -bound, bound)
        b = jax.random.uniform(kb, (1, fan_out), jnp.float32, -bound, bound)
        return w, b

    w1, b1 = lin(ks[0], ks[1], STATE_DIM, H1)
    w2, b2 = lin(ks[2], ks[3], H1, H2)
    w3, b3 = lin(ks[4], ks[5], H2, ACTION_DIM)
    return (w1, b1, w2, b2, w3, b3)


def actor_ref(s, params):
    """Pure-JAX f32 reference (PyTorch semantics) for correctness check."""
    w1, b1, w2, b2, w3, b3 = params
    h1 = jnp.maximum(s @ w1 + b1, 0.0)
    h2 = jnp.maximum(h1 @ w2 + b2, 0.0)
    return jnp.tanh(h2 @ w3 + b3)


if __name__ == "__main__":
    key = jax.random.PRNGKey(0)
    k_params, k_state, k_state_big = jax.random.split(key, 3)

    params = init_params(k_params)
    prepared = prepare_params(params)

    # Small batch (matches typical per-env-step inference shape).
    batch = 4
    s = jax.random.normal(k_state, (batch, STATE_DIM), jnp.float32)

    out = actor_forward(s, prepared)
    out = jax.block_until_ready(out)
    ref = actor_ref(s, params)

    assert out.shape == (batch, ACTION_DIM)
    # bf16 dot operands => loosened tolerance vs the f32 reference.
    assert jnp.allclose(out, ref, atol=3e-2, rtol=3e-2), "mismatch vs JAX reference"

    # Larger batch exercises the batch grid (multiple grid steps, weights stay in VMEM).
    big = 512
    s_big = jax.random.normal(k_state_big, (big, STATE_DIM), jnp.float32)
    out_big = jax.block_until_ready(actor_forward(s_big, prepared))
    ref_big = actor_ref(s_big, params)
    assert out_big.shape == (big, ACTION_DIM)
    assert jnp.allclose(out_big, ref_big, atol=3e-2, rtol=3e-2), "mismatch (batched)"

    print("KERNEL_OK")
</pallas_src>

<mosaic_0001>
module attributes {stable_mosaic.version = 11 : i64} {
  func.func @actor_kernel(%arg0: i32, %arg1: memref<8x24xf32, #tpu.memory_space<vmem>>, %arg2: memref<24x800xbf16, #tpu.memory_space<vmem>>, %arg3: memref<1x800xf32, #tpu.memory_space<vmem>>, %arg4: memref<800x600xbf16, #tpu.memory_space<vmem>>, %arg5: memref<1x600xf32, #tpu.memory_space<vmem>>, %arg6: memref<600x128xbf16, #tpu.memory_space<vmem>>, %arg7: memref<1x128xf32, #tpu.memory_space<vmem>>, %arg8: memref<8x128xf32, #tpu.memory_space<vmem>>) attributes {dimension_semantics = [#tpu.dimension_semantics<parallel>], iteration_bounds = array<i64: 1>, scalar_prefetch = 0 : i64, scratch_operands = 0 : i64, tpu.core_type = #tpu.core_type<tc>, window_params = [{transform_indices = @transform_0, window_bounds = array<i64: 8, 24>}, {pipeline_mode = #tpu.pipeline_mode<synchronous>, transform_indices = @transform_1, window_bounds = array<i64: 24, 800>}, {pipeline_mode = #tpu.pipeline_mode<synchronous>, transform_indices = @transform_2, window_bounds = array<i64: 1, 800>}, {pipeline_mode = #tpu.pipeline_mode<synchronous>, transform_indices = @transform_3, window_bounds = array<i64: 800, 600>}, {pipeline_mode = #tpu.pipeline_mode<synchronous>, transform_indices = @transform_4, window_bounds = array<i64: 1, 600>}, {pipeline_mode = #tpu.pipeline_mode<synchronous>, transform_indices = @transform_5, window_bounds = array<i64: 600, 128>}, {pipeline_mode = #tpu.pipeline_mode<synchronous>, transform_indices = @transform_6, window_bounds = array<i64: 1, 128>}, {transform_indices = @transform_7, window_bounds = array<i64: 8, 128>}]} {
    %c0 = arith.constant 0 : index
    %c0_0 = arith.constant 0 : index
    %0 = vector.load %arg1[%c0, %c0_0] : memref<8x24xf32, #tpu.memory_space<vmem>>, vector<8x24xf32>
    %1 = arith.truncf %0 : vector<8x24xf32> to vector<8x24xbf16>
    %c0_1 = arith.constant 0 : index
    %c0_2 = arith.constant 0 : index
    %2 = vector.load %arg2[%c0_1, %c0_2] : memref<24x800xbf16, #tpu.memory_space<vmem>>, vector<24x800xbf16>
    %cst = arith.constant dense<0.000000e+00> : vector<8x800xf32>
    %3 = tpu.matmul %1, %2, %cst {dimension_numbers = #tpu.dot_dimension_numbers<[1], [0], [0], [1], [0, 0, 1, 1], [], []>} : vector<8x24xbf16>, vector<24x800xbf16>, vector<8x800xf32> -> vector<8x800xf32>
    %c0_3 = arith.constant 0 : index
    %c0_4 = arith.constant 0 : index
    %4 = vector.load %arg3[%c0_3, %c0_4] : memref<1x800xf32, #tpu.memory_space<vmem>>, vector<1x800xf32>
    %5 = vector.broadcast %4 : vector<1x800xf32> to vector<8x800xf32>
    %6 = arith.addf %3, %5 : vector<8x800xf32>
    %cst_5 = arith.constant 0.000000e+00 : f32
    %7 = vector.broadcast %cst_5 : f32 to vector<8x800xf32>
    %8 = arith.maximumf %6, %7 : vector<8x800xf32>
    %9 = arith.truncf %8 : vector<8x800xf32> to vector<8x800xbf16>
    %c0_6 = arith.constant 0 : index
    %c0_7 = arith.constant 0 : index
    %10 = vector.load %arg4[%c0_6, %c0_7] : memref<800x600xbf16, #tpu.memory_space<vmem>>, vector<800x600xbf16>
    %cst_8 = arith.constant dense<0.000000e+00> : vector<8x600xf32>
    %11 = tpu.matmul %9, %10, %cst_8 {dimension_numbers = #tpu.dot_dimension_numbers<[1], [0], [0], [1], [0, 0, 1, 1], [], []>} : vector<8x800xbf16>, vector<800x600xbf16>, vector<8x600xf32> -> vector<8x600xf32>
    %c0_9 = arith.constant 0 : index
    %c0_10 = arith.constant 0 : index
    %12 = vector.load %arg5[%c0_9, %c0_10] : memref<1x600xf32, #tpu.memory_space<vmem>>, vector<1x600xf32>
    %13 = vector.broadcast %12 : vector<1x600xf32> to vector<8x600xf32>
    %14 = arith.addf %11, %13 : vector<8x600xf32>
    %cst_11 = arith.constant 0.000000e+00 : f32
    %15 = vector.broadcast %cst_11 : f32 to vector<8x600xf32>
    %16 = arith.maximumf %14, %15 : vector<8x600xf32>
    %17 = arith.truncf %16 : vector<8x600xf32> to vector<8x600xbf16>
    %c0_12 = arith.constant 0 : index
    %c0_13 = arith.constant 0 : index
    %18 = vector.load %arg6[%c0_12, %c0_13] : memref<600x128xbf16, #tpu.memory_space<vmem>>, vector<600x128xbf16>
    %cst_14 = arith.constant dense<0.000000e+00> : vector<8x128xf32>
    %19 = tpu.matmul %17, %18, %cst_14 {dimension_numbers = #tpu.dot_dimension_numbers<[1], [0], [0], [1], [0, 0, 1, 1], [], []>} : vector<8x600xbf16>, vector<600x128xbf16>, vector<8x128xf32> -> vector<8x128xf32>
    %c0_15 = arith.constant 0 : index
    %c0_16 = arith.constant 0 : index
    %20 = vector.load %arg7[%c0_15, %c0_16] : memref<1x128xf32, #tpu.memory_space<vmem>>, vector<1x128xf32>
    %21 = vector.broadcast %20 : vector<1x128xf32> to vector<8x128xf32>
    %22 = arith.addf %19, %21 : vector<8x128xf32>
    %23 = math.tanh %22 : vector<8x128xf32>
    %c0_17 = arith.constant 0 : index
    %c0_18 = arith.constant 0 : index
    %24 = vector.load %arg8[%c0_17, %c0_18] : memref<8x128xf32, #tpu.memory_space<vmem>>, vector<8x128xf32>
    tpu.vector_store %arg8[%c0_17, %c0_18], %23 {strides = array<i32>} : memref<8x128xf32, #tpu.memory_space<vmem>>, vector<8x128xf32>,
    return
  }
  func.func @transform_0(%arg0: i32) -> (i32, i32) {
    %c0_i32 = arith.constant 0 : i32
    %c0_i32_0 = arith.constant 0 : i32
    return %arg0, %c0_i32 : i32, i32
  }
  func.func @transform_1(%arg0: i32) -> (i32, i32) {
    %c0_i32 = arith.constant 0 : i32
    %c0_i32_0 = arith.constant 0 : i32
    %c0_i32_1 = arith.constant 0 : i32
    return %c0_i32, %c0_i32_0 : i32, i32
  }
  func.func @transform_2(%arg0: i32) -> (i32, i32) {
    %c0_i32 = arith.constant 0 : i32
    %c0_i32_0 = arith.constant 0 : i32
    %c0_i32_1 = arith.constant 0 : i32
    return %c0_i32, %c0_i32_0 : i32, i32
  }
  func.func @transform_3(%arg0: i32) -> (i32, i32) {
    %c0_i32 = arith.constant 0 : i32
    %c0_i32_0 = arith.constant 0 : i32
    %c0_i32_1 = arith.constant 0 : i32
    return %c0_i32, %c0_i32_0 : i32, i32
  }
  func.func @transform_4(%arg0: i32) -> (i32, i32) {
    %c0_i32 = arith.constant 0 : i32
    %c0_i32_0 = arith.constant 0 : i32
    %c0_i32_1 = arith.constant 0 : i32
    return %c0_i32, %c0_i32_0 : i32, i32
  }
  func.func @transform_5(%arg0: i32) -> (i32, i32) {
    %c0_i32 = arith.constant 0 : i32
    %c0_i32_0 = arith.constant 0 : i32
    %c0_i32_1 = arith.constant 0 : i32
    return %c0_i32, %c0_i32_0 : i32, i32
  }
  func.func @transform_6(%arg0: i32) -> (i32, i32) {
    %c0_i32 = arith.constant 0 : i32
    %c0_i32_0 = arith.constant 0 : i32
    %c0_i32_1 = arith.constant 0 : i32
    return %c0_i32, %c0_i32_0 : i32, i32
  }
  func.func @transform_7(%arg0: i32) -> (i32, i32) {
    %c0_i32 = arith.constant 0 : i32
    %c0_i32_0 = arith.constant 0 : i32
    return %arg0, %c0_i32 : i32, i32
  }
}

</mosaic_0001>

<llo_original>
// kernel: actor_forward.1
$region0: #{actor_forward.1}
  #allocation0 [shape = 'u32[]', space=smem, size = 0x4, offset = 0x4, fixed_abs, tag = 'smem constant byte address 0x4 - core index']
  #allocation1 [shape = 'u32[72,128]{1,0:T(1,128)}', space=vmem, size = 0x9000, scoped, tag = 'internal scratch']
  %s0 = inlined_call_operand.vmem [shape: f32[8,24], index: 0, kind: input, shape index: {}]
  %s1 = inlined_call_operand.hbm [shape: bf16[24,800], index: 1, kind: input, shape index: {}]
  %s2 = inlined_call_operand.vmem [shape: f32[1,800], index: 2, kind: input, shape index: {}]
  %s3 = inlined_call_operand.hbm [shape: bf16[800,600], index: 3, kind: input, shape index: {}]
  %s4 = inlined_call_operand.vmem [shape: f32[1,600], index: 4, kind: input, shape index: {}]
  %s5 = inlined_call_operand.hbm [shape: bf16[600,128], index: 5, kind: input, shape index: {}]
  %s6 = inlined_call_operand.vmem [shape: f32[1,128], index: 6, kind: input, shape index: {}]
  %s7 = inlined_call_operand.vmem [shape: f32[8,128], index: 7, kind: output, shape index: {}]
  %s8 = sld [smem:[#allocation0]]
  $region50: #{actor_forward.1} parent=0
    _
  %s10 = ssub.s32 1, %s8
  %s11 = scalar_select 0, %s10, %s8
  $region1: #{actor_forward.1} parent=0
    #allocation2 [shape = 'u8[43008]{0}', space=vmem, size = 0xa800, scoped, tag = 'input window, operand 1, single buffered']
    #allocation3 [shape = 's32[1]{0}', space=sflag, size = 0x4, scoped, tag = 'scoped memory for actor_forward.1']
    #allocation4 [shape = 'u8[1024000]{0}', space=vmem, size = 0xfa000, scoped, tag = 'input window, operand 3, single buffered']
    #allocation5 [shape = 's32[1]{0}', space=sflag, size = 0x4, scoped, tag = 'scoped memory for actor_forward.1']
    #allocation6 [shape = 'u8[153600]{0}', space=vmem, size = 0x25800, scoped, tag = 'input window, operand 5, single buffered']
    %12 = vsyncpa [#allocation3], 0
    %13 = vsyncpa [#allocation5], 0
    // Predicated region
    $region2: #{actor_forward.1} parent=1 // pred_check
      _
    $region3: #{actor_forward.1} parent=1 // pred_check_branch
      %15 = sbr.rel (0) target = $region5
    $region4: #{actor_forward.1} parent=1 // pred_region
      _
    $region5: #{actor_forward.1} parent=1 // pred_fallthru
      _
    // Predicated region
    $region6: #{actor_forward.1} parent=1 // pred_check
      _
    $region7: #{actor_forward.1} parent=1 // pred_check_branch
      %17 = sbr.rel (0) target = $region9
    $region8: #{actor_forward.1} parent=1 // pred_region
      %19 = vsyncadd [#allocation3], 0
      %s20 = sshll.u32 %s1, 4
      %s21 = int_to_ptr.hbm [resolvable:$true] %s20
      %s22 = sshll.u32 [#allocation2], 4
      %s23 = int_to_ptr.vmem [resolvable:$true] %s22
      %28 = dma.hbm_to_vmem [thread:$0]  %s21, 1344, %s23, [#allocation3], 448, 448, 28
    $region9: #{actor_forward.1} parent=1 // pred_fallthru
      _
    // Predicated region
    $region10: #{actor_forward.1} parent=1 // pred_check
      _
    $region11: #{actor_forward.1} parent=1 // pred_check_branch
      %30 = sbr.rel (0) target = $region13
    $region12: #{actor_forward.1} parent=1 // pred_region
      _
    $region13: #{actor_forward.1} parent=1 // pred_fallthru
      _
    // Predicated region
    $region14: #{actor_forward.1} parent=1 // pred_check
      _
    $region15: #{actor_forward.1} parent=1 // pred_check_branch
      %32 = sbr.rel (0) target = $region17
    $region16: #{actor_forward.1} parent=1 // pred_region
      %34 = vsyncadd [#allocation5], 0
      %s35 = sshll.u32 %s3, 4
      %s36 = int_to_ptr.hbm [resolvable:$true] %s35
      %s37 = sshll.u32 [#allocation4], 4
      %s38 = int_to_ptr.vmem [resolvable:$true] %s37
      %43 = dma.hbm_to_vmem [thread:$0]  %s36, 32000, %s38, [#allocation5], 320, 320, 20
    $region17: #{actor_forward.1} parent=1 // pred_fallthru
      _
    // Predicated region
    $region18: #{actor_forward.1} parent=1 // pred_check
      _
    $region19: #{actor_forward.1} parent=1 // pred_check_branch
      %45 = sbr.rel (0) target = $region21
    $region20: #{actor_forward.1} parent=1 // pred_region
      _
    $region21: #{actor_forward.1} parent=1 // pred_fallthru
      _
    // Predicated region
    $region22: #{actor_forward.1} parent=1 // pred_check
      _
    $region23: #{actor_forward.1} parent=1 // pred_check_branch
      %47 = sbr.rel (0) target = $region25
    $region24: #{actor_forward.1} parent=1 // pred_region
      %49 = vsyncadd [#allocation5], 0
      %s50 = sshll.u32 %s5, 4
      %s51 = int_to_ptr.hbm [resolvable:$true] %s50
      %s52 = sshll.u32 [#allocation6], 4
      %s53 = int_to_ptr.vmem [resolvable:$true] %s52
      %58 = dma.hbm_to_vmem [thread:$0]  %s51, 4800, %s53, [#allocation5], 64, 64, 4
    $region25: #{actor_forward.1} parent=1 // pred_fallthru
      _
    // Predicated region
    $region26: #{actor_forward.1} parent=1 // pred_check
      _
    $region27: #{actor_forward.1} parent=1 // pred_check_branch
      %60 = sbr.rel (0) target = $region29
    $region28: #{actor_forward.1} parent=1 // pred_region
      _
    $region29: #{actor_forward.1} parent=1 // pred_fallthru
      _
    // Predicated region
    $region30: #{actor_forward.1} parent=1 // pred_check
      _
    $region31: #{actor_forward.1} parent=1 // pred_check_branch
      %62 = sbr.rel (0) target = $region33
    $region32: #{actor_forward.1} parent=1 // pred_region
      %64 = dma.done [#allocation3], 1344
    $region33: #{actor_forward.1} parent=1 // pred_fallthru
      _
    // Predicated region
    $region34: #{actor_forward.1} parent=1 // pred_check
      _
    $region35: #{actor_forward.1} parent=1 // pred_check_branch
      %66 = sbr.rel (0) target = $region37
    $region36: #{actor_forward.1} parent=1 // pred_region
      %68 = dma.done [#allocation5], 32000
    $region37: #{actor_forward.1} parent=1 // pred_fallthru
      _
    // Predicated region
    $region38: #{actor_forward.1} parent=1 // pred_check
      _
    $region39: #{actor_forward.1} parent=1 // pred_check_branch
      %70 = sbr.rel (0) target = $region41
    $region40: #{actor_forward.1} parent=1 // pred_region
      %72 = dma.done [#allocation5], 4800
    $region41: #{actor_forward.1} parent=1 // pred_fallthru
      _
    %v74 = vld [vmem:[%s0] sm:$0xff]
    %v75 = vpack.c.bf16 %v74, %v74
    %v76 = vld [vmem:[#allocation2] sm:$0xff]
    %v77 = vld [vmem:[#allocation2 + $0x8] sm:$0xff]
    %v78 = vld [vmem:[#allocation2 + $0x10] sm:$0xff]
    %v79 = vld [vmem:[#allocation2 + $0x18] sm:$0xf]
    %v80 = vld [vmem:[#allocation2 + $0x1c] sm:$0xff]
    %v81 = vld [vmem:[#allocation2 + $0x24] sm:$0xff]
    %v82 = vld [vmem:[#allocation2 + $0x2c] sm:$0xff]
    %v83 = vld [vmem:[#allocation2 + $0x34] sm:$0xf]
    %v84 = vld [vmem:[#allocation2 + $0x38] sm:$0xff]
    %v85 = vld [vmem:[#allocation2 + $0x40] sm:$0xff]
    %v86 = vld [vmem:[#allocation2 + $0x48] sm:$0xff]
    %v87 = vld [vmem:[#allocation2 + $0x50] sm:$0xf]
    %v88 = vld [vmem:[%s2] sm:$0x7f]
    %v90 = vperm.slane %v88, 0
    %v91 = vperm.slane %v88, 1
    %v92 = vperm.slane %v88, 2
    %v93 = vperm.slane %v88, 3
    %v94 = vperm.slane %v88, 4
    %v95 = vperm.slane %v88, 5
    %v96 = vperm.slane %v88, 6
    %v116 = vunpack.c.l.b16 %v76
    %v117 = vunpack.c.h.b16 %v76
    %v118 = vunpack.c.l.b16 %v77
    %v119 = vunpack.c.h.b16 %v77
    %v120 = vunpack.c.l.b16 %v78
    %v121 = vunpack.c.h.b16 %v78
    %v122 = vunpack.c.l.b16 %v79
    %v123 = vunpack.c.l.b16 %v80
    %v124 = vunpack.c.h.b16 %v80
    %v125 = vunpack.c.l.b16 %v81
    %v126 = vunpack.c.h.b16 %v81
    %v127 = vunpack.c.l.b16 %v82
    %v128 = vunpack.c.h.b16 %v82
    %v129 = vunpack.c.l.b16 %v83
    %v130 = vunpack.c.l.b16 %v84
    %v131 = vunpack.c.h.b16 %v84
    %v132 = vunpack.c.l.b16 %v85
    %v133 = vunpack.c.h.b16 %v85
    %v134 = vunpack.c.l.b16 %v86
    %v135 = vunpack.c.h.b16 %v86
    %v136 = vunpack.c.l.b16 %v87
    %v137 = vpack.c.b16 %v123, %v116
    %v138 = vpack.c.b16 %v124, %v117
    %v139 = vpack.c.b16 %v125, %v118
    %v140 = vpack.c.b16 %v126, %v119
    %v141 = vpack.c.b16 %v127, %v120
    %v142 = vpack.c.b16 %v128, %v121
    %v143 = vpack.c.b16 %v129, %v122
    %v144 = vpack.c.b16 %v130, %v130
    %v145 = vpack.c.b16 %v131, %v131
    %v146 = vpack.c.b16 %v132, %v132
    %v147 = vpack.c.b16 %v133, %v133
    %v148 = vpack.c.b16 %v134, %v134
    %v149 = vpack.c.b16 %v135, %v135
    %v150 = vpack.c.b16 %v136, %v136
    %vm158 = vcmask 195584
    %v160 = vsel %vm158, %v75, 0
    %vm162 = vcmask 1043456
    %v164 = vsel %vm162, %v144, 0
    %v167 = vsel %vm162, %v145, 0
    %v170 = vsel %vm162, %v146, 0
    %v173 = vsel %vm162, %v147, 0
    %v176 = vsel %vm162, %v148, 0
    %v179 = vsel %vm162, %v149, 0
    %v182 = vsel %vm162, %v150, 0
    %184 = vmatpush.bf16.msra.mxu0 0
    %185 = vmatpush.bf16.msra.mxu0 0
    %186 = vmatpush.bf16.msra.mxu0 0
    %187 = vmatpush.bf16.msra.mxu0 0
    %188 = vmatpush.bf16.msra.mxu0 0
    %189 = vmatpush.bf16.msra.mxu0 0
    %190 = vmatpush.bf16.msra.mxu0 %v164
    %191 = vmatpush.bf16.msra.mxu0 %v137
    %192 = vmatmul.bf16.gmra.mxu0 %v160
    %v193 = vpop.f32.mrf.mxu0
    %v194 = vadd.f32 %v90, %v193
    %v195 = vpop.f32.mrf.mxu0
    %196 = vdwg.mxu0
    %197 = vmatpush.bf16.msra.mxu0 0
    %198 = vmatpush.bf16.msra.mxu0 0
    %199 = vmatpush.bf16.msra.mxu0 0
    %200 = vmatpush.bf16.msra.mxu0 0
    %201 = vmatpush.bf16.msra.mxu0 0
    %202 = vmatpush.bf16.msra.mxu0 0
    %203 = vmatpush.bf16.msra.mxu0 %v167
    %204 = vmatpush.bf16.msra.mxu0 %v138
    %205 = vmatmul.bf16.gmra.mxu0 %v160
    %v206 = vpop.f32.mrf.mxu0
    %v207 = vadd.f32 %v91, %v206
    %v208 = vpop.f32.mrf.mxu0
    %209 = vdwg.mxu0
    %210 = vmatpush.bf16.msra.mxu0 0
    %211 = vmatpush.bf16.msra.mxu0 0
    %212 = vmatpush.bf16.msra.mxu0 0
    %213 = vmatpush.bf16.msra.mxu0 0
    %214 = vmatpush.bf16.msra.mxu0 0
    %215 = vmatpush.bf16.msra.mxu0 0
    %216 = vmatpush.bf16.msra.mxu0 %v170
    %217 = vmatpush.bf16.msra.mxu0 %v139
    %218 = vmatmul.bf16.gmra.mxu0 %v160
    %v219 = vpop.f32.mrf.mxu0
    %v220 = vadd.f32 %v92, %v219
    %v221 = vpop.f32.mrf.mxu0
    %222 = vdwg.mxu0
    %223 = vmatpush.bf16.msra.mxu0 0
    %224 = vmatpush.bf16.msra.mxu0 0
    %225 = vmatpush.bf16.msra.mxu0 0
    %226 = vmatpush.bf16.msra.mxu0 0
    %227 = vmatpush.bf16.msra.mxu0 0
    %228 = vmatpush.bf16.msra.mxu0 0
    %229 = vmatpush.bf16.msra.mxu0 %v173
    %230 = vmatpush.bf16.msra.mxu0 %v140
    %231 = vmatmul.bf16.gmra.mxu0 %v160
    %v232 = vpop.f32.mrf.mxu0
    %v233 = vadd.f32 %v93, %v232
    %v234 = vpop.f32.mrf.mxu0
    %235 = vdwg.mxu0
    %236 = vmatpush.bf16.msra.mxu0 0
    %237 = vmatpush.bf16.msra.mxu0 0
    %238 = vmatpush.bf16.msra.mxu0 0
    %239 = vmatpush.bf16.msra.mxu0 0
    %240 = vmatpush.bf16.msra.mxu0 0
    %241 = vmatpush.bf16.msra.mxu0 0
    %242 = vmatpush.bf16.msra.mxu0 %v176
    %243 = vmatpush.bf16.msra.mxu0 %v141
    %244 = vmatmul.bf16.gmra.mxu0 %v160
    %v245 = vpop.f32.mrf.mxu0
    %v246 = vadd.f32 %v94, %v245
    %v247 = vpop.f32.mrf.mxu0
    %248 = vdwg.mxu0
    %249 = vmatpush.bf16.msra.mxu0 0
    %250 = vmatpush.bf16.msra.mxu0 0
    %251 = vmatpush.bf16.msra.mxu0 0
    %252 = vmatpush.bf16.msra.mxu0 0
    %253 = vmatpush.bf16.msra.mxu0 0
    %254 = vmatpush.bf16.msra.mxu0 0
    %255 = vmatpush.bf16.msra.mxu0 %v179
    %256 = vmatpush.bf16.msra.mxu0 %v142
    %257 = vmatmul.bf16.gmra.mxu0 %v160
    %v258 = vpop.f32.mrf.mxu0
    %v259 = vadd.f32 %v95, %v258
    %v260 = vpop.f32.mrf.mxu0
    %261 = vdwg.mxu0
    %262 = vmatpush.bf16.msra.mxu0 0
    %263 = vmatpush.bf16.msra.mxu0 0
    %264 = vmatpush.bf16.msra.mxu0 0
    %265 = vmatpush.bf16.msra.mxu0 0
    %266 = vmatpush.bf16.msra.mxu0 0
    %267 = vmatpush.bf16.msra.mxu0 0
    %268 = vmatpush.bf16.msra.mxu0 %v182
    %269 = vmatpush.bf16.msra.mxu0 %v143
    %270 = vmatmul.bf16.gmra.mxu0 %v160
    %v271 = vpop.f32.mrf.mxu0
    %v272 = vadd.f32 %v96, %v271
    %v273 = vpop.f32.mrf.mxu0
    %274 = vdwg.mxu0
    %v275 = vmax.f32 %v194, 0.0
    %v276 = vmax.f32 %v207, 0.0
    %v277 = vmax.f32 %v220, 0.0
    %v278 = vmax.f32 %v233, 0.0
    %v279 = vmax.f32 %v246, 0.0
    %v280 = vmax.f32 %v259, 0.0
    %v281 = vmax.f32 %v272, 0.0
    %v282 = vpack.c.bf16 %v275, %v275
    %v283 = vpack.c.bf16 %v276, %v276
    %v284 = vpack.c.bf16 %v277, %v277
    %v285 = vpack.c.bf16 %v278, %v278
    %v286 = vpack.c.bf16 %v279, %v279
    %v287 = vpack.c.bf16 %v280, %v280
    %v288 = vpack.c.bf16 %v281, %v281
    %v289 = vld [vmem:[#allocation4] sm:$0xff]
    %v290 = vld [vmem:[#allocation4 + $0x8] sm:$0xff]
    %v291 = vld [vmem:[#allocation4 + $0x10] sm:$0xf]
    %v292 = vld [vmem:[#allocation4 + $0x14] sm:$0xff]
    %v293 = vld [vmem:[#allocation4 + $0x1c] sm:$0xff]
    %v294 = vld [vmem:[#allocation4 + $0x24] sm:$0xf]
    %v295 = vld [vmem:[#allocation4 + $0x28] sm:$0xff]
    %v296 = vld [vmem:[#allocation4 + $0x30] sm:$0xff]
    %v297 = vld [vmem:[#allocation4 + $0x38] sm:$0xf]
    %v298 = vld [vmem:[#allocation4 + $0x3c] sm:$0xff]
    %v299 = vld [vmem:[#allocation4 + $0x44] sm:$0xff]
    %v300 = vld [vmem:[#allocation4 + $0x4c] sm:$0xf]
    %v301 = vld [vmem:[#allocation4 + $0x50] sm:$0xff]
    %v302 = vld [vmem:[#allocation4 + $0x58] sm:$0xff]
    %v303 = vld [vmem:[#allocation4 + $0x60] sm:$0xf]
    %v304 = vld [vmem:[#allocation4 + $0x64] sm:$0xff]
    %v305 = vld [vmem:[#allocation4 + $0x6c] sm:$0xff]
    %v306 = vld [vmem:[#allocation4 + $0x74] sm:$0xf]
    %v307 = vld [vmem:[#allocation4 + $0x78] sm:$0xff]
    %v308 = vld [vmem:[#allocation4 + $0x80] sm:$0xff]
    %v309 = vld [vmem:[#allocation4 + $0x88] sm:$0xf]
    %v310 = vld [vmem:[#allocation4 + $0x8c] sm:$0xff]
    %v311 = vld [vmem:[#allocation4 + $0x94] sm:$0xff]
    %v312 = vld [vmem:[#allocation4 + $0x9c] sm:$0xf]
    %v313 = vld [vmem:[#allocation4 + $0xa0] sm:$0xff]
    %v314 = vld [vmem:[#allocation4 + $0xa8] sm:$0xff]
    %v315 = vld [vmem:[#allocation4 + $0xb0] sm:$0xf]
    %v316 = vld [vmem:[#allocation4 + $0xb4] sm:$0xff]
    %v317 = vld [vmem:[#allocation4 + $0xbc] sm:$0xff]
    %v318 = vld [vmem:[#allocation4 + $0xc4] sm:$0xf]
    %v319 = vld [vmem:[#allocation4 + $0xc8] sm:$0xff]
    %v320 = vld [vmem:[#allocation4 + $0xd0] sm:$0xff]
    %v321 = vld [vmem:[#allocation4 + $0xd8] sm:$0xf]
    %v322 = vld [vmem:[#allocation4 + $0xdc] sm:$0xff]
    %v323 = vld [vmem:[#allocation4 + $0xe4] sm:$0xff]
    %v324 = vld [vmem:[#allocation4 + $0xec] sm:$0xf]
    %v325 = vld [vmem:[#allocation4 + $0xf0] sm:$0xff]
    %v326 = vld [vmem:[#allocation4 + $0xf8] sm:$0xff]
    %v327 = vld [vmem:[#allocation4 + $0x100] sm:$0xf]
    %v328 = vld [vmem:[#allocation4 + $0x104] sm:$0xff]
    %v329 = vld [vmem:[#allocation4 + $0x10c] sm:$0xff]
    %v330 = vld [vmem:[#allocation4 + $0x114] sm:$0xf]
    %v331 = vld [vmem:[#allocation4 + $0x118] sm:$0xff]
    %v332 = vld [vmem:[#allocation4 + $0x120] sm:$0xff]
    %v333 = vld [vmem:[#allocation4 + $0x128] sm:$0xf]
    %v334 = vld [vmem:[#allocation4 + $0x12c] sm:$0xff]
    %v335 = vld [vmem:[#allocation4 + $0x134] sm:$0xff]
    %v336 = vld [vmem:[#allocation4 + $0x13c] sm:$0xf]
    %v337 = vld [vmem:[#allocation4 + $0x140] sm:$0xff]
    %v338 = vld [vmem:[#allocation4 + $0x148] sm:$0xff]
    %v339 = vld [vmem:[#allocation4 + $0x150] sm:$0xf]
    %v340 = vld [vmem:[#allocation4 + $0x154] sm:$0xff]
    %v341 = vld [vmem:[#allocation4 + $0x15c] sm:$0xff]
    %v342 = vld [vmem:[#allocation4 + $0x164] sm:$0xf]
    %v343 = vld [vmem:[#allocation4 + $0x168] sm:$0xff]
    %v344 = vld [vmem:[#allocation4 + $0x170] sm:$0xff]
    %v345 = vld [vmem:[#allocation4 + $0x178] sm:$0xf]
    %v346 = vld [vmem:[#allocation4 + $0x17c] sm:$0xff]
    %v347 = vld [vmem:[#allocation4 + $0x184] sm:$0xff]
    %v348 = vld [vmem:[#allocation4 + $0x18c] sm:$0xf]
    %v349 = vld [vmem:[#allocation4 + $0x190] sm:$0xff]
    %v350 = vld [vmem:[#allocation4 + $0x198] sm:$0xff]
    %v351 = vld [vmem:[#allocation4 + $0x1a0] sm:$0xf]
    %v352 = vld [vmem:[#allocation4 + $0x1a4] sm:$0xff]
    %v353 = vld [vmem:[#allocation4 + $0x1ac] sm:$0xff]
    %v354 = vld [vmem:[#allocation4 + $0x1b4] sm:$0xf]
    %v355 = vld [vmem:[#allocation4 + $0x1b8] sm:$0xff]
    %v356 = vld [vmem:[#allocation4 + $0x1c0] sm:$0xff]
    %v357 = vld [vmem:[#allocation4 + $0x1c8] sm:$0xf]
    %v358 = vld [vmem:[#allocation4 + $0x1cc] sm:$0xff]
    %v359 = vld [vmem:[#allocation4 + $0x1d4] sm:$0xff]
    %v360 = vld [vmem:[#allocation4 + $0x1dc] sm:$0xf]
    %v361 = vld [vmem:[#allocation4 + $0x1e0] sm:$0xff]
    %v362 = vld [vmem:[#allocation4 + $0x1e8] sm:$0xff]
    %v363 = vld [vmem:[#allocation4 + $0x1f0] sm:$0xf]
    %v364 = vld [vmem:[#allocation4 + $0x1f4] sm:$0xff]
    %v365 = vld [vmem:[#allocation4 + $0x1fc] sm:$0xff]
    %v366 = vld [vmem:[#allocation4 + $0x204] sm:$0xf]
    %v367 = vld [vmem:[#allocation4 + $0x208] sm:$0xff]
    %v368 = vld [vmem:[#allocation4 + $0x210] sm:$0xff]
    %v369 = vld [vmem:[#allocation4 + $0x218] sm:$0xf]
    %v370 = vld [vmem:[#allocation4 + $0x21c] sm:$0xff]
    %v371 = vld [vmem:[#allocation4 + $0x224] sm:$0xff]
    %v372 = vld [vmem:[#allocation4 + $0x22c] sm:$0xf]
    %v373 = vld [vmem:[#allocation4 + $0x230] sm:$0xff]
    %v374 = vld [vmem:[#allocation4 + $0x238] sm:$0xff]
    %v375 = vld [vmem:[#allocation4 + $0x240] sm:$0xf]
    %v376 = vld [vmem:[#allocation4 + $0x244] sm:$0xff]
    %v377 = vld [vmem:[#allocation4 + $0x24c] sm:$0xff]
    %v378 = vld [vmem:[#allocation4 + $0x254] sm:$0xf]
    %v379 = vld [vmem:[#allocation4 + $0x258] sm:$0xff]
    %v380 = vld [vmem:[#allocation4 + $0x260] sm:$0xff]
    %v381 = vld [vmem:[#allocation4 + $0x268] sm:$0xf]
    %v382 = vld [vmem:[#allocation4 + $0x26c] sm:$0xff]
    %v383 = vld [vmem:[#allocation4 + $0x274] sm:$0xff]
    %v384 = vld [vmem:[#allocation4 + $0x27c] sm:$0xf]
    %v385 = vld [vmem:[#allocation4 + $0x280] sm:$0xff]
    %v386 = vld [vmem:[#allocation4 + $0x288] sm:$0xff]
    %v387 = vld [vmem:[#allocation4 + $0x290] sm:$0xf]
    %v388 = vld [vmem:[#allocation4 + $0x294] sm:$0xff]
    %v389 = vld [vmem:[#allocation4 + $0x29c] sm:$0xff]
    %v390 = vld [vmem:[#allocation4 + $0x2a4] sm:$0xf]
    %v391 = vld [vmem:[#allocation4 + $0x2a8] sm:$0xff]
    %v392 = vld [vmem:[#allocation4 + $0x2b0] sm:$0xff]
    %v393 = vld [vmem:[#allocation4 + $0x2b8] sm:$0xf]
    %v394 = vld [vmem:[#allocation4 + $0x2bc] sm:$0xff]
    %v395 = vld [vmem:[#allocation4 + $0x2c4] sm:$0xff]
    %v396 = vld [vmem:[#allocation4 + $0x2cc] sm:$0xf]
    %v397 = vld [vmem:[#allocation4 + $0x2d0] sm:$0xff]
    %v398 = vld [vmem:[#allocation4 + $0x2d8] sm:$0xff]
    %v399 = vld [vmem:[#allocation4 + $0x2e0] sm:$0xf]
    %v400 = vld [vmem:[#allocation4 + $0x2e4] sm:$0xff]
    %v401 = vld [vmem:[#allocation4 + $0x2ec] sm:$0xff]
    %v402 = vld [vmem:[#allocation4 + $0x2f4] sm:$0xf]
    %v403 = vld [vmem:[#allocation4 + $0x2f8] sm:$0xff]
    %v404 = vld [vmem:[#allocation4 + $0x300] sm:$0xff]
    %v405 = vld [vmem:[#allocation4 + $0x308] sm:$0xf]
    %v406 = vld [vmem:[#allocation4 + $0x30c] sm:$0xff]
    %v407 = vld [vmem:[#allocation4 + $0x314] sm:$0xff]
    %v408 = vld [vmem:[#allocation4 + $0x31c] sm:$0xf]
    %v409 = vld [vmem:[#allocation4 + $0x320] sm:$0xff]
    %v410 = vld [vmem:[#allocation4 + $0x328] sm:$0xff]
    %v411 = vld [vmem:[#allocation4 + $0x330] sm:$0xf]
    %v412 = vld [vmem:[#allocation4 + $0x334] sm:$0xff]
    %v413 = vld [vmem:[#allocation4 + $0x33c] sm:$0xff]
    %v414 = vld [vmem:[#allocation4 + $0x344] sm:$0xf]
    %v415 = vld [vmem:[#allocation4 + $0x348] sm:$0xff]
    %v416 = vld [vmem:[#allocation4 + $0x350] sm:$0xff]
    %v417 = vld [vmem:[#allocation4 + $0x358] sm:$0xf]
    %v418 = vld [vmem:[#allocation4 + $0x35c] sm:$0xff]
    %v419 = vld [vmem:[#allocation4 + $0x364] sm:$0xff]
    %v420 = vld [vmem:[#allocation4 + $0x36c] sm:$0xf]
    %v421 = vld [vmem:[#allocation4 + $0x370] sm:$0xff]
    %v422 = vld [vmem:[#allocation4 + $0x378] sm:$0xff]
    %v423 = vld [vmem:[#allocation4 + $0x380] sm:$0xf]
    %v424 = vld [vmem:[#allocation4 + $0x384] sm:$0xff]
    %v425 = vld [vmem:[#allocation4 + $0x38c] sm:$0xff]
    %v426 = vld [vmem:[#allocation4 + $0x394] sm:$0xf]
    %v427 = vld [vmem:[#allocation4 + $0x398] sm:$0xff]
    %v428 = vld [vmem:[#allocation4 + $0x3a0] sm:$0xff]
    %v429 = vld [vmem:[#allocation4 + $0x3a8] sm:$0xf]
    %v430 = vld [vmem:[#allocation4 + $0x3ac] sm:$0xff]
    %v431 = vld [vmem:[#allocation4 + $0x3b4] sm:$0xff]
    %v432 = vld [vmem:[#allocation4 + $0x3bc] sm:$0xf]
    %v433 = vld [vmem:[#allocation4 + $0x3c0] sm:$0xff]
    %v434 = vld [vmem:[#allocation4 + $0x3c8] sm:$0xff]
    %v435 = vld [vmem:[#allocation4 + $0x3d0] sm:$0xf]
    %v436 = vld [vmem:[#allocation4 + $0x3d4] sm:$0xff]
    %v437 = vld [vmem:[#allocation4 + $0x3dc] sm:$0xff]
    %v438 = vld [vmem:[#allocation4 + $0x3e4] sm:$0xf]
    %v439 = vld [vmem:[#allocation4 + $0x3e8] sm:$0xff]
    %v440 = vld [vmem:[#allocation4 + $0x3f0] sm:$0xff]
    %v441 = vld [vmem:[#allocation4 + $0x3f8] sm:$0xf]
    %v442 = vld [vmem:[#allocation4 + $0x3fc] sm:$0xff]
    %v443 = vld [vmem:[#allocation4 + $0x404] sm:$0xff]
    %v444 = vld [vmem:[#allocation4 + $0x40c] sm:$0xf]
    %v445 = vld [vmem:[#allocation4 + $0x410] sm:$0xff]
    %v446 = vld [vmem:[#allocation4 + $0x418] sm:$0xff]
    %v447 = vld [vmem:[#allocation4 + $0x420] sm:$0xf]
    %v448 = vld [vmem:[#allocation4 + $0x424] sm:$0xff]
    %v449 = vld [vmem:[#allocation4 + $0x42c] sm:$0xff]
    %v450 = vld [vmem:[#allocation4 + $0x434] sm:$0xf]
    %v451 = vld [vmem:[#allocation4 + $0x438] sm:$0xff]
    %v452 = vld [vmem:[#allocation4 + $0x440] sm:$0xff]
    %v453 = vld [vmem:[#allocation4 + $0x448] sm:$0xf]
    %v454 = vld [vmem:[#allocation4 + $0x44c] sm:$0xff]
    %v455 = vld [vmem:[#allocation4 + $0x454] sm:$0xff]
    %v456 = vld [vmem:[#allocation4 + $0x45c] sm:$0xf]
    %v457 = vld [vmem:[#allocation4 + $0x460] sm:$0xff]
    %v458 = vld [vmem:[#allocation4 + $0x468] sm:$0xff]
    %v459 = vld [vmem:[#allocation4 + $0x470] sm:$0xf]
    %v460 = vld [vmem:[#allocation4 + $0x474] sm:$0xff]
    %v461 = vld [vmem:[#allocation4 + $0x47c] sm:$0xff]
    %v462 = vld [vmem:[#allocation4 + $0x484] sm:$0xf]
    %v463 = vld [vmem:[#allocation4 + $0x488] sm:$0xff]
    %v464 = vld [vmem:[#allocation4 + $0x490] sm:$0xff]
    %v465 = vld [vmem:[#allocation4 + $0x498] sm:$0xf]
    %v466 = vld [vmem:[#allocation4 + $0x49c] sm:$0xff]
    %v467 = vld [vmem:[#allocation4 + $0x4a4] sm:$0xff]
    %v468 = vld [vmem:[#allocation4 + $0x4ac] sm:$0xf]
    %v469 = vld [vmem:[#allocation4 + $0x4b0] sm:$0xff]
    %v470 = vld [vmem:[#allocation4 + $0x4b8] sm:$0xff]
    %v471 = vld [vmem:[#allocation4 + $0x4c0] sm:$0xf]
    %v472 = vld [vmem:[#allocation4 + $0x4c4] sm:$0xff]
    %v473 = vld [vmem:[#allocation4 + $0x4cc] sm:$0xff]
    %v474 = vld [vmem:[#allocation4 + $0x4d4] sm:$0xf]
    %v475 = vld [vmem:[#allocation4 + $0x4d8] sm:$0xff]
    %v476 = vld [vmem:[#allocation4 + $0x4e0] sm:$0xff]
    %v477 = vld [vmem:[#allocation4 + $0x4e8] sm:$0xf]
    %v478 = vld [vmem:[#allocation4 + $0x4ec] sm:$0xff]
    %v479 = vld [vmem:[#allocation4 + $0x4f4] sm:$0xff]
    %v480 = vld [vmem:[#allocation4 + $0x4fc] sm:$0xf]
    %v481 = vld [vmem:[#allocation4 + $0x500] sm:$0xff]
    %v482 = vld [vmem:[#allocation4 + $0x508] sm:$0xff]
    %v483 = vld [vmem:[#allocation4 + $0x510] sm:$0xf]
    %v484 = vld [vmem:[#allocation4 + $0x514] sm:$0xff]
    %v485 = vld [vmem:[#allocation4 + $0x51c] sm:$0xff]
    %v486 = vld [vmem:[#allocation4 + $0x524] sm:$0xf]
    %v487 = vld [vmem:[#allocation4 + $0x528] sm:$0xff]
    %v488 = vld [vmem:[#allocation4 + $0x530] sm:$0xff]
    %v489 = vld [vmem:[#allocation4 + $0x538] sm:$0xf]
    %v490 = vld [vmem:[#allocation4 + $0x53c] sm:$0xff]
    %v491 = vld [vmem:[#allocation4 + $0x544] sm:$0xff]
    %v492 = vld [vmem:[#allocation4 + $0x54c] sm:$0xf]
    %v493 = vld [vmem:[#allocation4 + $0x550] sm:$0xff]
    %v494 = vld [vmem:[#allocation4 + $0x558] sm:$0xff]
    %v495 = vld [vmem:[#allocation4 + $0x560] sm:$0xf]
    %v496 = vld [vmem:[#allocation4 + $0x564] sm:$0xff]
    %v497 = vld [vmem:[#allocation4 + $0x56c] sm:$0xff]
    %v498 = vld [vmem:[#allocation4 + $0x574] sm:$0xf]
    %v499 = vld [vmem:[#allocation4 + $0x578] sm:$0xff]
    %v500 = vld [vmem:[#allocation4 + $0x580] sm:$0xff]
    %v501 = vld [vmem:[#allocation4 + $0x588] sm:$0xf]
    %v502 = vld [vmem:[#allocation4 + $0x58c] sm:$0xff]
    %v503 = vld [vmem:[#allocation4 + $0x594] sm:$0xff]
    %v504 = vld [vmem:[#allocation4 + $0x59c] sm:$0xf]
    %v505 = vld [vmem:[#allocation4 + $0x5a0] sm:$0xff]
    %v506 = vld [vmem:[#allocation4 + $0x5a8] sm:$0xff]
    %v507 = vld [vmem:[#allocation4 + $0x5b0] sm:$0xf]
    %v508 = vld [vmem:[#allocation4 + $0x5b4] sm:$0xff]
    %v509 = vld [vmem:[#allocation4 + $0x5bc] sm:$0xff]
    %v510 = vld [vmem:[#allocation4 + $0x5c4] sm:$0xf]
    %v511 = vld [vmem:[#allocation4 + $0x5c8] sm:$0xff]
    %v512 = vld [vmem:[#allocation4 + $0x5d0] sm:$0xff]
    %v513 = vld [vmem:[#allocation4 + $0x5d8] sm:$0xf]
    %v514 = vld [vmem:[#allocation4 + $0x5dc] sm:$0xff]
    %v515 = vld [vmem:[#allocation4 + $0x5e4] sm:$0xff]
    %v516 = vld [vmem:[#allocation4 + $0x5ec] sm:$0xf]
    %v517 = vld [vmem:[#allocation4 + $0x5f0] sm:$0xff]
    %v518 = vld [vmem:[#allocation4 + $0x5f8] sm:$0xff]
    %v519 = vld [vmem:[#allocation4 + $0x600] sm:$0xf]
    %v520 = vld [vmem:[#allocation4 + $0x604] sm:$0xff]
    %v521 = vld [vmem:[#allocation4 + $0x60c] sm:$0xff]
    %v522 = vld [vmem:[#allocation4 + $0x614] sm:$0xf]
    %v523 = vld [vmem:[#allocation4 + $0x618] sm:$0xff]
    %v524 = vld [vmem:[#allocation4 + $0x620] sm:$0xff]
    %v525 = vld [vmem:[#allocation4 + $0x628] sm:$0xf]
    %v526 = vld [vmem:[#allocation4 + $0x62c] sm:$0xff]
    %v527 = vld [vmem:[#allocation4 + $0x634] sm:$0xff]
    %v528 = vld [vmem:[#allocation4 + $0x63c] sm:$0xf]
    %v529 = vld [vmem:[#allocation4 + $0x640] sm:$0xff]
    %v530 = vld [vmem:[#allocation4 + $0x648] sm:$0xff]
    %v531 = vld [vmem:[#allocation4 + $0x650] sm:$0xf]
    %v532 = vld [vmem:[#allocation4 + $0x654] sm:$0xff]
    %v533 = vld [vmem:[#allocation4 + $0x65c] sm:$0xff]
    %v534 = vld [vmem:[#allocation4 + $0x664] sm:$0xf]
    %v535 = vld [vmem:[#allocation4 + $0x668] sm:$0xff]
    %v536 = vld [vmem:[#allocation4 + $0x670] sm:$0xff]
    %v537 = vld [vmem:[#allocation4 + $0x678] sm:$0xf]
    %v538 = vld [vmem:[#allocation4 + $0x67c] sm:$0xff]
    %v539 = vld [vmem:[#allocation4 + $0x684] sm:$0xff]
    %v540 = vld [vmem:[#allocation4 + $0x68c] sm:$0xf]
    %v541 = vld [vmem:[#allocation4 + $0x690] sm:$0xff]
    %v542 = vld [vmem:[#allocation4 + $0x698] sm:$0xff]
    %v543 = vld [vmem:[#allocation4 + $0x6a0] sm:$0xf]
    %v544 = vld [vmem:[#allocation4 + $0x6a4] sm:$0xff]
    %v545 = vld [vmem:[#allocation4 + $0x6ac] sm:$0xff]
    %v546 = vld [vmem:[#allocation4 + $0x6b4] sm:$0xf]
    %v547 = vld [vmem:[#allocation4 + $0x6b8] sm:$0xff]
    %v548 = vld [vmem:[#allocation4 + $0x6c0] sm:$0xff]
    %v549 = vld [vmem:[#allocation4 + $0x6c8] sm:$0xf]
    %v550 = vld [vmem:[#allocation4 + $0x6cc] sm:$0xff]
    %v551 = vld [vmem:[#allocation4 + $0x6d4] sm:$0xff]
    %v552 = vld [vmem:[#allocation4 + $0x6dc] sm:$0xf]
    %v553 = vld [vmem:[#allocation4 + $0x6e0] sm:$0xff]
    %v554 = vld [vmem:[#allocation4 + $0x6e8] sm:$0xff]
    %v555 = vld [vmem:[#allocation4 + $0x6f0] sm:$0xf]
    %v556 = vld [vmem:[#allocation4 + $0x6f4] sm:$0xff]
    %v557 = vld [vmem:[#allocation4 + $0x6fc] sm:$0xff]
    %v558 = vld [vmem:[#allocation4 + $0x704] sm:$0xf]
    %v559 = vld [vmem:[#allocation4 + $0x708] sm:$0xff]
    %v560 = vld [vmem:[#allocation4 + $0x710] sm:$0xff]
    %v561 = vld [vmem:[#allocation4 + $0x718] sm:$0xf]
    %v562 = vld [vmem:[#allocation4 + $0x71c] sm:$0xff]
    %v563 = vld [vmem:[#allocation4 + $0x724] sm:$0xff]
    %v564 = vld [vmem:[#allocation4 + $0x72c] sm:$0xf]
    %v565 = vld [vmem:[#allocation4 + $0x730] sm:$0xff]
    %v566 = vld [vmem:[#allocation4 + $0x738] sm:$0xff]
    %v567 = vld [vmem:[#allocation4 + $0x740] sm:$0xf]
    %v568 = vld [vmem:[#allocation4 + $0x744] sm:$0xff]
    %v569 = vld [vmem:[#allocation4 + $0x74c] sm:$0xff]
    %v570 = vld [vmem:[#allocation4 + $0x754] sm:$0xf]
    %v571 = vld [vmem:[#allocation4 + $0x758] sm:$0xff]
    %v572 = vld [vmem:[#allocation4 + $0x760] sm:$0xff]
    %v573 = vld [vmem:[#allocation4 + $0x768] sm:$0xf]
    %v574 = vld [vmem:[#allocation4 + $0x76c] sm:$0xff]
    %v575 = vld [vmem:[#allocation4 + $0x774] sm:$0xff]
    %v576 = vld [vmem:[#allocation4 + $0x77c] sm:$0xf]
    %v577 = vld [vmem:[#allocation4 + $0x780] sm:$0xff]
    %v578 = vld [vmem:[#allocation4 + $0x788] sm:$0xff]
    %v579 = vld [vmem:[#allocation4 + $0x790] sm:$0xf]
    %v580 = vld [vmem:[#allocation4 + $0x794] sm:$0xff]
    %v581 = vld [vmem:[#allocation4 + $0x79c] sm:$0xff]
    %v582 = vld [vmem:[#allocation4 + $0x7a4] sm:$0xf]
    %v583 = vld [vmem:[#allocation4 + $0x7a8] sm:$0xff]
    %v584 = vld [vmem:[#allocation4 + $0x7b0] sm:$0xff]
    %v585 = vld [vmem:[#allocation4 + $0x7b8] sm:$0xf]
    %v586 = vld [vmem:[#allocation4 + $0x7bc] sm:$0xff]
    %v587 = vld [vmem:[#allocation4 + $0x7c4] sm:$0xff]
    %v588 = vld [vmem:[#allocation4 + $0x7cc] sm:$0xf]
    %v589 = vld [vmem:[%s4] sm:$0x1f]
    %v591 = vperm.slane %v589, 0
    %v592 = vperm.slane %v589, 1
    %v593 = vperm.slane %v589, 2
    %v594 = vperm.slane %v589, 3
    %v595 = vperm.slane %v589, 4
    %v901 = vunpack.c.l.b16 %v289
    %v902 = vunpack.c.h.b16 %v289
    %v903 = vunpack.c.l.b16 %v290
    %v904 = vunpack.c.h.b16 %v290
    %v905 = vunpack.c.l.b16 %v291
    %v906 = vunpack.c.l.b16 %v292
    %v907 = vunpack.c.h.b16 %v292
    %v908 = vunpack.c.l.b16 %v293
    %v909 = vunpack.c.h.b16 %v293
    %v910 = vunpack.c.l.b16 %v294
    %v911 = vunpack.c.l.b16 %v295
    %v912 = vunpack.c.h.b16 %v295
    %v913 = vunpack.c.l.b16 %v296
    %v914 = vunpack.c.h.b16 %v296
    %v915 = vunpack.c.l.b16 %v297
    %v916 = vunpack.c.l.b16 %v298
    %v917 = vunpack.c.h.b16 %v298
    %v918 = vunpack.c.l.b16 %v299
    %v919 = vunpack.c.h.b16 %v299
    %v920 = vunpack.c.l.b16 %v300
    %v921 = vunpack.c.l.b16 %v301
    %v922 = vunpack.c.h.b16 %v301
    %v923 = vunpack.c.l.b16 %v302
    %v924 = vunpack.c.h.b16 %v302
    %v925 = vunpack.c.l.b16 %v303
    %v926 = vunpack.c.l.b16 %v304
    %v927 = vunpack.c.h.b16 %v304
    %v928 = vunpack.c.l.b16 %v305
    %v929 = vunpack.c.h.b16 %v305
    %v930 = vunpack.c.l.b16 %v306
    %v931 = vunpack.c.l.b16 %v307
    %v932 = vunpack.c.h.b16 %v307
    %v933 = vunpack.c.l.b16 %v308
    %v934 = vunpack.c.h.b16 %v308
    %v935 = vunpack.c.l.b16 %v309
    %v936 = vunpack.c.l.b16 %v310
    %v937 = vunpack.c.h.b16 %v310
    %v938 = vunpack.c.l.b16 %v311
    %v939 = vunpack.c.h.b16 %v311
    %v940 = vunpack.c.l.b16 %v312
    %v941 = vunpack.c.l.b16 %v313
    %v942 = vunpack.c.h.b16 %v313
    %v943 = vunpack.c.l.b16 %v314
    %v944 = vunpack.c.h.b16 %v314
    %v945 = vunpack.c.l.b16 %v315
    %v946 = vunpack.c.l.b16 %v316
    %v947 = vunpack.c.h.b16 %v316
    %v948 = vunpack.c.l.b16 %v317
    %v949 = vunpack.c.h.b16 %v317
    %v950 = vunpack.c.l.b16 %v318
    %v951 = vunpack.c.l.b16 %v319
    %v952 = vunpack.c.h.b16 %v319
    %v953 = vunpack.c.l.b16 %v320
    %v954 = vunpack.c.h.b16 %v320
    %v955 = vunpack.c.l.b16 %v321
    %v956 = vunpack.c.l.b16 %v322
    %v957 = vunpack.c.h.b16 %v322
    %v958 = vunpack.c.l.b16 %v323
    %v959 = vunpack.c.h.b16 %v323
    %v960 = vunpack.c.l.b16 %v324
    %v961 = vunpack.c.l.b16 %v325
    %v962 = vunpack.c.h.b16 %v325
    %v963 = vunpack.c.l.b16 %v326
    %v964 = vunpack.c.h.b16 %v326
    %v965 = vunpack.c.l.b16 %v327
    %v966 = vunpack.c.l.b16 %v328
    %v967 = vunpack.c.h.b16 %v328
    %v968 = vunpack.c.l.b16 %v329
    %v969 = vunpack.c.h.b16 %v329
    %v970 = vunpack.c.l.b16 %v330
    %v971 = vunpack.c.l.b16 %v331
    %v972 = vunpack.c.h.b16 %v331
    %v973 = vunpack.c.l.b16 %v332
    %v974 = vunpack.c.h.b16 %v332
    %v975 = vunpack.c.l.b16 %v333
    %v976 = vunpack.c.l.b16 %v334
    %v977 = vunpack.c.h.b16 %v334
    %v978 = vunpack.c.l.b16 %v335
    %v979 = vunpack.c.h.b16 %v335
    %v980 = vunpack.c.l.b16 %v336
    %v981 = vunpack.c.l.b16 %v337
    %v982 = vunpack.c.h.b16 %v337
    %v983 = vunpack.c.l.b16 %v338
    %v984 = vunpack.c.h.b16 %v338
    %v985 = vunpack.c.l.b16 %v339
    %v986 = vunpack.c.l.b16 %v340
    %v987 = vunpack.c.h.b16 %v340
    %v988 = vunpack.c.l.b16 %v341
    %v989 = vunpack.c.h.b16 %v341
    %v990 = vunpack.c.l.b16 %v342
    %v991 = vunpack.c.l.b16 %v343
    %v992 = vunpack.c.h.b16 %v343
    %v993 = vunpack.c.l.b16 %v344
    %v994 = vunpack.c.h.b16 %v344
    %v995 = vunpack.c.l.b16 %v345
    %v996 = vunpack.c.l.b16 %v346
    %v997 = vunpack.c.h.b16 %v346
    %v998 = vunpack.c.l.b16 %v347
    %v999 = vunpack.c.h.b16 %v347
    %v1000 = vunpack.c.l.b16 %v348
    %v1001 = vunpack.c.l.b16 %v349
    %v1002 = vunpack.c.h.b16 %v349
    %v1003 = vunpack.c.l.b16 %v350
    %v1004 = vunpack.c.h.b16 %v350
    %v1005 = vunpack.c.l.b16 %v351
    %v1006 = vunpack.c.l.b16 %v352
    %v1007 = vunpack.c.h.b16 %v352
    %v1008 = vunpack.c.l.b16 %v353
    %v1009 = vunpack.c.h.b16 %v353
    %v1010 = vunpack.c.l.b16 %v354
    %v1011 = vunpack.c.l.b16 %v355
    %v1012 = vunpack.c.h.b16 %v355
    %v1013 = vunpack.c.l.b16 %v356
    %v1014 = vunpack.c.h.b16 %v356
    %v1015 = vunpack.c.l.b16 %v357
    %v1016 = vunpack.c.l.b16 %v358
    %v1017 = vunpack.c.h.b16 %v358
    %v1018 = vunpack.c.l.b16 %v359
    %v1019 = vunpack.c.h.b16 %v359
    %v1020 = vunpack.c.l.b16 %v360
    %v1021 = vunpack.c.l.b16 %v361
    %v1022 = vunpack.c.h.b16 %v361
    %v1023 = vunpack.c.l.b16 %v362
    %v1024 = vunpack.c.h.b16 %v362
    %v1025 = vunpack.c.l.b16 %v363
    %v1026 = vunpack.c.l.b16 %v364
    %v1027 = vunpack.c.h.b16 %v364
    %v1028 = vunpack.c.l.b16 %v365
    %v1029 = vunpack.c.h.b16 %v365
    %v1030 = vunpack.c.l.b16 %v366
    %v1031 = vunpack.c.l.b16 %v367
    %v1032 = vunpack.c.h.b16 %v367
    %v1033 = vunpack.c.l.b16 %v368
    %v1034 = vunpack.c.h.b16 %v368
    %v1035 = vunpack.c.l.b16 %v369
    %v1036 = vunpack.c.l.b16 %v370
    %v1037 = vunpack.c.h.b16 %v370
    %v1038 = vunpack.c.l.b16 %v371
    %v1039 = vunpack.c.h.b16 %v371
    %v1040 = vunpack.c.l.b16 %v372
    %v1041 = vunpack.c.l.b16 %v373
    %v1042 = vunpack.c.h.b16 %v373
    %v1043 = vunpack.c.l.b16 %v374
    %v1044 = vunpack.c.h.b16 %v374
    %v1045 = vunpack.c.l.b16 %v375
    %v1046 = vunpack.c.l.b16 %v376
    %v1047 = vunpack.c.h.b16 %v376
    %v1048 = vunpack.c.l.b16 %v377
    %v1049 = vunpack.c.h.b16 %v377
    %v1050 = vunpack.c.l.b16 %v378
    %v1051 = vunpack.c.l.b16 %v379
    %v1052 = vunpack.c.h.b16 %v379
    %v1053 = vunpack.c.l.b16 %v380
    %v1054 = vunpack.c.h.b16 %v380
    %v1055 = vunpack.c.l.b16 %v381
    %v1056 = vunpack.c.l.b16 %v382
    %v1057 = vunpack.c.h.b16 %v382
    %v1058 = vunpack.c.l.b16 %v383
    %v1059 = vunpack.c.h.b16 %v383
    %v1060 = vunpack.c.l.b16 %v384
    %v1061 = vunpack.c.l.b16 %v385
    %v1062 = vunpack.c.h.b16 %v385
    %v1063 = vunpack.c.l.b16 %v386
    %v1064 = vunpack.c.h.b16 %v386
    %v1065 = vunpack.c.l.b16 %v387
    %v1066 = vunpack.c.l.b16 %v388
    %v1067 = vunpack.c.h.b16 %v388
    %v1068 = vunpack.c.l.b16 %v389
    %v1069 = vunpack.c.h.b16 %v389
    %v1070 = vunpack.c.l.b16 %v390
    %v1071 = vunpack.c.l.b16 %v391
    %v1072 = vunpack.c.h.b16 %v391
    %v1073 = vunpack.c.l.b16 %v392
    %v1074 = vunpack.c.h.b16 %v392
    %v1075 = vunpack.c.l.b16 %v393
    %v1076 = vunpack.c.l.b16 %v394
    %v1077 = vunpack.c.h.b16 %v394
    %v1078 = vunpack.c.l.b16 %v395
    %v1079 = vunpack.c.h.b16 %v395
    %v1080 = vunpack.c.l.b16 %v396
    %v1081 = vunpack.c.l.b16 %v397
    %v1082 = vunpack.c.h.b16 %v397
    %v1083 = vunpack.c.l.b16 %v398
    %v1084 = vunpack.c.h.b16 %v398
    %v1085 = vunpack.c.l.b16 %v399
    %v1086 = vunpack.c.l.b16 %v400
    %v1087 = vunpack.c.h.b16 %v400
    %v1088 = vunpack.c.l.b16 %v401
    %v1089 = vunpack.c.h.b16 %v401
    %v1090 = vunpack.c.l.b16 %v402
    %v1091 = vunpack.c.l.b16 %v403
    %v1092 = vunpack.c.h.b16 %v403
    %v1093 = vunpack.c.l.b16 %v404
    %v1094 = vunpack.c.h.b16 %v404
    %v1095 = vunpack.c.l.b16 %v405
    %v1096 = vunpack.c.l.b16 %v406
    %v1097 = vunpack.c.h.b16 %v406
    %v1098 = vunpack.c.l.b16 %v407
    %v1099 = vunpack.c.h.b16 %v407
    %v1100 = vunpack.c.l.b16 %v408
    %v1101 = vunpack.c.l.b16 %v409
    %v1102 = vunpack.c.h.b16 %v409
    %v1103 = vunpack.c.l.b16 %v410
    %v1104 = vunpack.c.h.b16 %v410
    %v1105 = vunpack.c.l.b16 %v411
    %v1106 = vunpack.c.l.b16 %v412
    %v1107 = vunpack.c.h.b16 %v412
    %v1108 = vunpack.c.l.b16 %v413
    %v1109 = vunpack.c.h.b16 %v413
    %v1110 = vunpack.c.l.b16 %v414
    %v1111 = vunpack.c.l.b16 %v415
    %v1112 = vunpack.c.h.b16 %v415
    %v1113 = vunpack.c.l.b16 %v416
    %v1114 = vunpack.c.h.b16 %v416
    %v1115 = vunpack.c.l.b16 %v417
    %v1116 = vunpack.c.l.b16 %v418
    %v1117 = vunpack.c.h.b16 %v418
    %v1118 = vunpack.c.l.b16 %v419
    %v1119 = vunpack.c.h.b16 %v419
    %v1120 = vunpack.c.l.b16 %v420
    %v1121 = vunpack.c.l.b16 %v421
    %v1122 = vunpack.c.h.b16 %v421
    %v1123 = vunpack.c.l.b16 %v422
    %v1124 = vunpack.c.h.b16 %v422
    %v1125 = vunpack.c.l.b16 %v423
    %v1126 = vunpack.c.l.b16 %v424
    %v1127 = vunpack.c.h.b16 %v424
    %v1128 = vunpack.c.l.b16 %v425
    %v1129 = vunpack.c.h.b16 %v425
    %v1130 = vunpack.c.l.b16 %v426
    %v1131 = vunpack.c.l.b16 %v427
    %v1132 = vunpack.c.h.b16 %v427
    %v1133 = vunpack.c.l.b16 %v428
    %v1134 = vunpack.c.h.b16 %v428
    %v1135 = vunpack.c.l.b16 %v429
    %v1136 = vunpack.c.l.b16 %v430
    %v1137 = vunpack.c.h.b16 %v430
    %v1138 = vunpack.c.l.b16 %v431
    %v1139 = vunpack.c.h.b16 %v431
    %v1140 = vunpack.c.l.b16 %v432
    %v1141 = vunpack.c.l.b16 %v433
    %v1142 = vunpack.c.h.b16 %v433
    %v1143 = vunpack.c.l.b16 %v434
    %v1144 = vunpack.c.h.b16 %v434
    %v1145 = vunpack.c.l.b16 %v435
    %v1146 = vunpack.c.l.b16 %v436
    %v1147 = vunpack.c.h.b16 %v436
    %v1148 = vunpack.c.l.b16 %v437
    %v1149 = vunpack.c.h.b16 %v437
    %v1150 = vunpack.c.l.b16 %v438
    %v1151 = vunpack.c.l.b16 %v439
    %v1152 = vunpack.c.h.b16 %v439
    %v1153 = vunpack.c.l.b16 %v440
    %v1154 = vunpack.c.h.b16 %v440
    %v1155 = vunpack.c.l.b16 %v441
    %v1156 = vunpack.c.l.b16 %v442
    %v1157 = vunpack.c.h.b16 %v442
    %v1158 = vunpack.c.l.b16 %v443
    %v1159 = vunpack.c.h.b16 %v443
    %v1160 = vunpack.c.l.b16 %v444
    %v1161 = vunpack.c.l.b16 %v445
    %v1162 = vunpack.c.h.b16 %v445
    %v1163 = vunpack.c.l.b16 %v446
    %v1164 = vunpack.c.h.b16 %v446
    %v1165 = vunpack.c.l.b16 %v447
    %v1166 = vunpack.c.l.b16 %v448
    %v1167 = vunpack.c.h.b16 %v448
    %v1168 = vunpack.c.l.b16 %v449
    %v1169 = vunpack.c.h.b16 %v449
    %v1170 = vunpack.c.l.b16 %v450
    %v1171 = vunpack.c.l.b16 %v451
    %v1172 = vunpack.c.h.b16 %v451
    %v1173 = vunpack.c.l.b16 %v452
    %v1174 = vunpack.c.h.b16 %v452
    %v1175 = vunpack.c.l.b16 %v453
    %v1176 = vunpack.c.l.b16 %v454
    %v1177 = vunpack.c.h.b16 %v454
    %v1178 = vunpack.c.l.b16 %v455
    %v1179 = vunpack.c.h.b16 %v455
    %v1180 = vunpack.c.l.b16 %v456
    %v1181 = vunpack.c.l.b16 %v457
    %v1182 = vunpack.c.h.b16 %v457
    %v1183 = vunpack.c.l.b16 %v458
    %v1184 = vunpack.c.h.b16 %v458
    %v1185 = vunpack.c.l.b16 %v459
    %v1186 = vunpack.c.l.b16 %v460
    %v1187 = vunpack.c.h.b16 %v460
    %v1188 = vunpack.c.l.b16 %v461
    %v1189 = vunpack.c.h.b16 %v461
    %v1190 = vunpack.c.l.b16 %v462
    %v1191 = vunpack.c.l.b16 %v463
    %v1192 = vunpack.c.h.b16 %v463
    %v1193 = vunpack.c.l.b16 %v464
    %v1194 = vunpack.c.h.b16 %v464
    %v1195 = vunpack.c.l.b16 %v465
    %v1196 = vunpack.c.l.b16 %v466
    %v1197 = vunpack.c.h.b16 %v466
    %v1198 = vunpack.c.l.b16 %v467
    %v1199 = vunpack.c.h.b16 %v467
    %v1200 = vunpack.c.l.b16 %v468
    %v1201 = vunpack.c.l.b16 %v469
    %v1202 = vunpack.c.h.b16 %v469
    %v1203 = vunpack.c.l.b16 %v470
    %v1204 = vunpack.c.h.b16 %v470
    %v1205 = vunpack.c.l.b16 %v471
    %v1206 = vunpack.c.l.b16 %v472
    %v1207 = vunpack.c.h.b16 %v472
    %v1208 = vunpack.c.l.b16 %v473
    %v1209 = vunpack.c.h.b16 %v473
    %v1210 = vunpack.c.l.b16 %v474
    %v1211 = vunpack.c.l.b16 %v475
    %v1212 = vunpack.c.h.b16 %v475
    %v1213 = vunpack.c.l.b16 %v476
    %v1214 = vunpack.c.h.b16 %v476
    %v1215 = vunpack.c.l.b16 %v477
    %v1216 = vunpack.c.l.b16 %v478
    %v1217 = vunpack.c.h.b16 %v478
    %v1218 = vunpack.c.l.b16 %v479
    %v1219 = vunpack.c.h.b16 %v479
    %v1220 = vunpack.c.l.b16 %v480
    %v1221 = vunpack.c.l.b16 %v481
    %v1222 = vunpack.c.h.b16 %v481
    %v1223 = vunpack.c.l.b16 %v482
    %v1224 = vunpack.c.h.b16 %v482
    %v1225 = vunpack.c.l.b16 %v483
    %v1226 = vunpack.c.l.b16 %v484
    %v1227 = vunpack.c.h.b16 %v484
    %v1228 = vunpack.c.l.b16 %v485
    %v1229 = vunpack.c.h.b16 %v485
    %v1230 = vunpack.c.l.b16 %v486
    %v1231 = vunpack.c.l.b16 %v487
    %v1232 = vunpack.c.h.b16 %v487
    %v1233 = vunpack.c.l.b16 %v488
    %v1234 = vunpack.c.h.b16 %v488
    %v1235 = vunpack.c.l.b16 %v489
    %v1236 = vunpack.c.l.b16 %v490
    %v1237 = vunpack.c.h.b16 %v490
    %v1238 = vunpack.c.l.b16 %v491
    %v1239 = vunpack.c.h.b16 %v491
    %v1240 = vunpack.c.l.b16 %v492
    %v1241 = vunpack.c.l.b16 %v493
    %v1242 = vunpack.c.h.b16 %v493
    %v1243 = vunpack.c.l.b16 %v494
    %v1244 = vunpack.c.h.b16 %v494
    %v1245 = vunpack.c.l.b16 %v495
    %v1246 = vunpack.c.l.b16 %v496
    %v1247 = vunpack.c.h.b16 %v496
    %v1248 = vunpack.c.l.b16 %v497
    %v1249 = vunpack.c.h.b16 %v497
    %v1250 = vunpack.c.l.b16 %v498
    %v1251 = vunpack.c.l.b16 %v499
    %v1252 = vunpack.c.h.b16 %v499
    %v1253 = vunpack.c.l.b16 %v500
    %v1254 = vunpack.c.h.b16 %v500
    %v1255 = vunpack.c.l.b16 %v501
    %v1256 = vunpack.c.l.b16 %v502
    %v1257 = vunpack.c.h.b16 %v502
    %v1258 = vunpack.c.l.b16 %v503
    %v1259 = vunpack.c.h.b16 %v503
    %v1260 = vunpack.c.l.b16 %v504
    %v1261 = vunpack.c.l.b16 %v505
    %v1262 = vunpack.c.h.b16 %v505
    %v1263 = vunpack.c.l.b16 %v506
    %v1264 = vunpack.c.h.b16 %v506
    %v1265 = vunpack.c.l.b16 %v507
    %v1266 = vunpack.c.l.b16 %v508
    %v1267 = vunpack.c.h.b16 %v508
    %v1268 = vunpack.c.l.b16 %v509
    %v1269 = vunpack.c.h.b16 %v509
    %v1270 = vunpack.c.l.b16 %v510
    %v1271 = vunpack.c.l.b16 %v511
    %v1272 = vunpack.c.h.b16 %v511
    %v1273 = vunpack.c.l.b16 %v512
    %v1274 = vunpack.c.h.b16 %v512
    %v1275 = vunpack.c.l.b16 %v513
    %v1276 = vunpack.c.l.b16 %v514
    %v1277 = vunpack.c.h.b16 %v514
    %v1278 = vunpack.c.l.b16 %v515
    %v1279 = vunpack.c.h.b16 %v515
    %v1280 = vunpack.c.l.b16 %v516
    %v1281 = vunpack.c.l.b16 %v517
    %v1282 = vunpack.c.h.b16 %v517
    %v1283 = vunpack.c.l.b16 %v518
    %v1284 = vunpack.c.h.b16 %v518
    %v1285 = vunpack.c.l.b16 %v519
    %v1286 = vunpack.c.l.b16 %v520
    %v1287 = vunpack.c.h.b16 %v520
    %v1288 = vunpack.c.l.b16 %v521
    %v1289 = vunpack.c.h.b16 %v521
    %v1290 = vunpack.c.l.b16 %v522
    %v1291 = vunpack.c.l.b16 %v523
    %v1292 = vunpack.c.h.b16 %v523
    %v1293 = vunpack.c.l.b16 %v524
    %v1294 = vunpack.c.h.b16 %v524
    %v1295 = vunpack.c.l.b16 %v525
    %v1296 = vunpack.c.l.b16 %v526
    %v1297 = vunpack.c.h.b16 %v526
    %v1298 = vunpack.c.l.b16 %v527
    %v1299 = vunpack.c.h.b16 %v527
    %v1300 = vunpack.c.l.b16 %v528
    %v1301 = vunpack.c.l.b16 %v529
    %v1302 = vunpack.c.h.b16 %v529
    %v1303 = vunpack.c.l.b16 %v530
    %v1304 = vunpack.c.h.b16 %v530
    %v1305 = vunpack.c.l.b16 %v531
    %v1306 = vunpack.c.l.b16 %v532
    %v1307 = vunpack.c.h.b16 %v532
    %v1308 = vunpack.c.l.b16 %v533
    %v1309 = vunpack.c.h.b16 %v533
    %v1310 = vunpack.c.l.b16 %v534
    %v1311 = vunpack.c.l.b16 %v535
    %v1312 = vunpack.c.h.b16 %v535
    %v1313 = vunpack.c.l.b16 %v536
    %v1314 = vunpack.c.h.b16 %v536
    %v1315 = vunpack.c.l.b16 %v537
    %v1316 = vunpack.c.l.b16 %v538
    %v1317 = vunpack.c.h.b16 %v538
    %v1318 = vunpack.c.l.b16 %v539
    %v1319 = vunpack.c.h.b16 %v539
    %v1320 = vunpack.c.l.b16 %v540
    %v1321 = vunpack.c.l.b16 %v541
    %v1322 = vunpack.c.h.b16 %v541
    %v1323 = vunpack.c.l.b16 %v542
    %v1324 = vunpack.c.h.b16 %v542
    %v1325 = vunpack.c.l.b16 %v543
    %v1326 = vunpack.c.l.b16 %v544
    %v1327 = vunpack.c.h.b16 %v544
    %v1328 = vunpack.c.l.b16 %v545
    %v1329 = vunpack.c.h.b16 %v545
    %v1330 = vunpack.c.l.b16 %v546
    %v1331 = vunpack.c.l.b16 %v547
    %v1332 = vunpack.c.h.b16 %v547
    %v1333 = vunpack.c.l.b16 %v548
    %v1334 = vunpack.c.h.b16 %v548
    %v1335 = vunpack.c.l.b16 %v549
    %v1336 = vunpack.c.l.b16 %v550
    %v1337 = vunpack.c.h.b16 %v550
    %v1338 = vunpack.c.l.b16 %v551
    %v1339 = vunpack.c.h.b16 %v551
    %v1340 = vunpack.c.l.b16 %v552
    %v1341 = vunpack.c.l.b16 %v553
    %v1342 = vunpack.c.h.b16 %v553
    %v1343 = vunpack.c.l.b16 %v554
    %v1344 = vunpack.c.h.b16 %v554
    %v1345 = vunpack.c.l.b16 %v555
    %v1346 = vunpack.c.l.b16 %v556
    %v1347 = vunpack.c.h.b16 %v556
    %v1348 = vunpack.c.l.b16 %v557
    %v1349 = vunpack.c.h.b16 %v557
    %v1350 = vunpack.c.l.b16 %v558
    %v1351 = vunpack.c.l.b16 %v559
    %v1352 = vunpack.c.h.b16 %v559
    %v1353 = vunpack.c.l.b16 %v560
    %v1354 = vunpack.c.h.b16 %v560
    %v1355 = vunpack.c.l.b16 %v561
    %v1356 = vunpack.c.l.b16 %v562
    %v1357 = vunpack.c.h.b16 %v562
    %v1358 = vunpack.c.l.b16 %v563
    %v1359 = vunpack.c.h.b16 %v563
    %v1360 = vunpack.c.l.b16 %v564
    %v1361 = vunpack.c.l.b16 %v565
    %v1362 = vunpack.c.h.b16 %v565
    %v1363 = vunpack.c.l.b16 %v566
    %v1364 = vunpack.c.h.b16 %v566
    %v1365 = vunpack.c.l.b16 %v567
    %v1366 = vunpack.c.l.b16 %v568
    %v1367 = vunpack.c.h.b16 %v568
    %v1368 = vunpack.c.l.b16 %v569
    %v1369 = vunpack.c.h.b16 %v569
    %v1370 = vunpack.c.l.b16 %v570
    %v1371 = vunpack.c.l.b16 %v571
    %v1372 = vunpack.c.h.b16 %v571
    %v1373 = vunpack.c.l.b16 %v572
    %v1374 = vunpack.c.h.b16 %v572
    %v1375 = vunpack.c.l.b16 %v573
    %v1376 = vunpack.c.l.b16 %v574
    %v1377 = vunpack.c.h.b16 %v574
    %v1378 = vunpack.c.l.b16 %v575
    %v1379 = vunpack.c.h.b16 %v575
    %v1380 = vunpack.c.l.b16 %v576
    %v1381 = vunpack.c.l.b16 %v577
    %v1382 = vunpack.c.h.b16 %v577
    %v1383 = vunpack.c.l.b16 %v578
    %v1384 = vunpack.c.h.b16 %v578
    %v1385 = vunpack.c.l.b16 %v579
    %v1386 = vunpack.c.l.b16 %v580
    %v1387 = vunpack.c.h.b16 %v580
    %v1388 = vunpack.c.l.b16 %v581
    %v1389 = vunpack.c.h.b16 %v581
    %v1390 = vunpack.c.l.b16 %v582
    %v1391 = vunpack.c.l.b16 %v583
    %v1392 = vunpack.c.h.b16 %v583
    %v1393 = vunpack.c.l.b16 %v584
    %v1394 = vunpack.c.h.b16 %v584
    %v1395 = vunpack.c.l.b16 %v585
    %v1396 = vunpack.c.l.b16 %v586
    %v1397 = vunpack.c.h.b16 %v586
    %v1398 = vunpack.c.l.b16 %v587
    %v1399 = vunpack.c.h.b16 %v587
    %v1400 = vunpack.c.l.b16 %v588
    %v1401 = vpack.c.b16 %v906, %v901
    %v1402 = vpack.c.b16 %v907, %v902
    %v1403 = vpack.c.b16 %v908, %v903
    %v1404 = vpack.c.b16 %v909, %v904
    %v1405 = vpack.c.b16 %v910, %v905
    %v1406 = vpack.c.b16 %v916, %v911
    %v1407 = vpack.c.b16 %v917, %v912
    %v1408 = vpack.c.b16 %v918, %v913
    %v1409 = vpack.c.b16 %v919, %v914
    %v1410 = vpack.c.b16 %v920, %v915
    %v1411 = vpack.c.b16 %v926, %v921
    %v1412 = vpack.c.b16 %v927, %v922
    %v1413 = vpack.c.b16 %v928, %v923
    %v1414 = vpack.c.b16 %v929, %v924
    %v1415 = vpack.c.b16 %v930, %v925
    %v1416 = vpack.c.b16 %v936, %v931
    %v1417 = vpack.c.b16 %v937, %v932
    %v1418 = vpack.c.b16 %v938, %v933
    %v1419 = vpack.c.b16 %v939, %v934
    %v1420 = vpack.c.b16 %v940, %v935
    %v1421 = vpack.c.b16 %v946, %v941
    %v1422 = vpack.c.b16 %v947, %v942
    %v1423 = vpack.c.b16 %v948, %v943
    %v1424 = vpack.c.b16 %v949, %v944
    %v1425 = vpack.c.b16 %v950, %v945
    %v1426 = vpack.c.b16 %v956, %v951
    %v1427 = vpack.c.b16 %v957, %v952
    %v1428 = vpack.c.b16 %v958, %v953
    %v1429 = vpack.c.b16 %v959, %v954
    %v1430 = vpack.c.b16 %v960, %v955
    %v1431 = vpack.c.b16 %v966, %v961
    %v1432 = vpack.c.b16 %v967, %v962
    %v1433 = vpack.c.b16 %v968, %v963
    %v1434 = vpack.c.b16 %v969, %v964
    %v1435 = vpack.c.b16 %v970, %v965
    %v1436 = vpack.c.b16 %v976, %v971
    %v1437 = vpack.c.b16 %v977, %v972
    %v1438 = vpack.c.b16 %v978, %v973
    %v1439 = vpack.c.b16 %v979, %v974
    %v1440 = vpack.c.b16 %v980, %v975
    %v1441 = vpack.c.b16 %v986, %v981
    %v1442 = vpack.c.b16 %v987, %v982
    %v1443 = vpack.c.b16 %v988, %v983
    %v1444 = vpack.c.b16 %v989, %v984
    %v1445 = vpack.c.b16 %v990, %v985
    %v1446 = vpack.c.b16 %v996, %v991
    %v1447 = vpack.c.b16 %v997, %v992
    %v1448 = vpack.c.b16 %v998, %v993
    %v1449 = vpack.c.b16 %v999, %v994
    %v1450 = vpack.c.b16 %v1000, %v995
    %v1451 = vpack.c.b16 %v1006, %v1001
    %v1452 = vpack.c.b16 %v1007, %v1002
    %v1453 = vpack.c.b16 %v1008, %v1003
    %v1454 = vpack.c.b16 %v1009, %v1004
    %v1455 = vpack.c.b16 %v1010, %v1005
    %v1456 = vpack.c.b16 %v1016, %v1011
    %v1457 = vpack.c.b16 %v1017, %v1012
    %v1458 = vpack.c.b16 %v1018, %v1013
    %v1459 = vpack.c.b16 %v1019, %v1014
    %v1460 = vpack.c.b16 %v1020, %v1015
    %v1461 = vpack.c.b16 %v1026, %v1021
    %v1462 = vpack.c.b16 %v1027, %v1022
    %v1463 = vpack.c.b16 %v1028, %v1023
    %v1464 = vpack.c.b16 %v1029, %v1024
    %v1465 = vpack.c.b16 %v1030, %v1025
    %v1466 = vpack.c.b16 %v1036, %v1031
    %v1467 = vpack.c.b16 %v1037, %v1032
    %v1468 = vpack.c.b16 %v1038, %v1033
    %v1469 = vpack.c.b16 %v1039, %v1034
    %v1470 = vpack.c.b16 %v1040, %v1035
    %v1471 = vpack.c.b16 %v1046, %v1041
    %v1472 = vpack.c.b16 %v1047, %v1042
    %v1473 = vpack.c.b16 %v1048, %v1043
    %v1474 = vpack.c.b16 %v1049, %v1044
    %v1475 = vpack.c.b16 %v1050, %v1045
    %v1476 = vpack.c.b16 %v1056, %v1051
    %v1477 = vpack.c.b16 %v1057, %v1052
    %v1478 = vpack.c.b16 %v1058, %v1053
    %v1479 = vpack.c.b16 %v1059, %v1054
    %v1480 = vpack.c.b16 %v1060, %v1055
    %v1481 = vpack.c.b16 %v1066, %v1061
    %v1482 = vpack.c.b16 %v1067, %v1062
    %v1483 = vpack.c.b16 %v1068, %v1063
    %v1484 = vpack.c.b16 %v1069, %v1064
    %v1485 = vpack.c.b16 %v1070, %v1065
    %v1486 = vpack.c.b16 %v1076, %v1071
    %v1487 = vpack.c.b16 %v1077, %v1072
    %v1488 = vpack.c.b16 %v1078, %v1073
    %v1489 = vpack.c.b16 %v1079, %v1074
    %v1490 = vpack.c.b16 %v1080, %v1075
    %v1491 = vpack.c.b16 %v1086, %v1081
    %v1492 = vpack.c.b16 %v1087, %v1082
    %v1493 = vpack.c.b16 %v1088, %v1083
    %v1494 = vpack.c.b16 %v1089, %v1084
    %v1495 = vpack.c.b16 %v1090, %v1085
    %v1496 = vpack.c.b16 %v1096, %v1091
    %v1497 = vpack.c.b16 %v1097, %v1092
    %v1498 = vpack.c.b16 %v1098, %v1093
    %v1499 = vpack.c.b16 %v1099, %v1094
    %v1500 = vpack.c.b16 %v1100, %v1095
    %v1501 = vpack.c.b16 %v1106, %v1101
    %v1502 = vpack.c.b16 %v1107, %v1102
    %v1503 = vpack.c.b16 %v1108, %v1103
    %v1504 = vpack.c.b16 %v1109, %v1104
    %v1505 = vpack.c.b16 %v1110, %v1105
    %v1506 = vpack.c.b16 %v1116, %v1111
    %v1507 = vpack.c.b16 %v1117, %v1112
    %v1508 = vpack.c.b16 %v1118, %v1113
    %v1509 = vpack.c.b16 %v1119, %v1114
    %v1510 = vpack.c.b16 %v1120, %v1115
    %v1511 = vpack.c.b16 %v1126, %v1121
    %v1512 = vpack.c.b16 %v1127, %v1122
    %v1513 = vpack.c.b16 %v1128, %v1123
    %v1514 = vpack.c.b16 %v1129, %v1124
    %v1515 = vpack.c.b16 %v1130, %v1125
    %v1516 = vpack.c.b16 %v1136, %v1131
    %v1517 = vpack.c.b16 %v1137, %v1132
    %v1518 = vpack.c.b16 %v1138, %v1133
    %v1519 = vpack.c.b16 %v1139, %v1134
    %v1520 = vpack.c.b16 %v1140, %v1135
    %v1521 = vpack.c.b16 %v1146, %v1141
    %v1522 = vpack.c.b16 %v1147, %v1142
    %v1523 = vpack.c.b16 %v1148, %v1143
    %v1524 = vpack.c.b16 %v1149, %v1144
    %v1525 = vpack.c.b16 %v1150, %v1145
    %v1526 = vpack.c.b16 %v1156, %v1151
    %v1527 = vpack.c.b16 %v1157, %v1152
    %v1528 = vpack.c.b16 %v1158, %v1153
    %v1529 = vpack.c.b16 %v1159, %v1154
    %v1530 = vpack.c.b16 %v1160, %v1155
    %v1531 = vpack.c.b16 %v1166, %v1161
    %v1532 = vpack.c.b16 %v1167, %v1162
    %v1533 = vpack.c.b16 %v1168, %v1163
    %v1534 = vpack.c.b16 %v1169, %v1164
    %v1535 = vpack.c.b16 %v1170, %v1165
    %v1536 = vpack.c.b16 %v1176, %v1171
    %v1537 = vpack.c.b16 %v1177, %v1172
    %v1538 = vpack.c.b16 %v1178, %v1173
    %v1539 = vpack.c.b16 %v1179, %v1174
    %v1540 = vpack.c.b16 %v1180, %v1175
    %v1541 = vpack.c.b16 %v1186, %v1181
    %v1542 = vpack.c.b16 %v1187, %v1182
    %v1543 = vpack.c.b16 %v1188, %v1183
    %v1544 = vpack.c.b16 %v1189, %v1184
    %v1545 = vpack.c.b16 %v1190, %v1185
    %v1546 = vpack.c.b16 %v1196, %v1191
    %v1547 = vpack.c.b16 %v1197, %v1192
    %v1548 = vpack.c.b16 %v1198, %v1193
    %v1549 = vpack.c.b16 %v1199, %v1194
    %v1550 = vpack.c.b16 %v1200, %v1195
    %v1551 = vpack.c.b16 %v1206, %v1201
    %v1552 = vpack.c.b16 %v1207, %v1202
    %v1553 = vpack.c.b16 %v1208, %v1203
    %v1554 = vpack.c.b16 %v1209, %v1204
    %v1555 = vpack.c.b16 %v1210, %v1205
    %v1556 = vpack.c.b16 %v1216, %v1211
    %v1557 = vpack.c.b16 %v1217, %v1212
    %v1558 = vpack.c.b16 %v1218, %v1213
    %v1559 = vpack.c.b16 %v1219, %v1214
    %v1560 = vpack.c.b16 %v1220, %v1215
    %v1561 = vpack.c.b16 %v1226, %v1221
    %v1562 = vpack.c.b16 %v1227, %v1222
    %v1563 = vpack.c.b16 %v1228, %v1223
    %v1564 = vpack.c.b16 %v1229, %v1224
    %v1565 = vpack.c.b16 %v1230, %v1225
    %v1566 = vpack.c.b16 %v1236, %v1231
    %v1567 = vpack.c.b16 %v1237, %v1232
    %v1568 = vpack.c.b16 %v1238, %v1233
    %v1569 = vpack.c.b16 %v1239, %v1234
    %v1570 = vpack.c.b16 %v1240, %v1235
    %v1571 = vpack.c.b16 %v1246, %v1241
    %v1572 = vpack.c.b16 %v1247, %v1242
    %v1573 = vpack.c.b16 %v1248, %v1243
    %v1574 = vpack.c.b16 %v1249, %v1244
    %v1575 = vpack.c.b16 %v1250, %v1245
    %v1576 = vpack.c.b16 %v1256, %v1251
    %v1577 = vpack.c.b16 %v1257, %v1252
    %v1578 = vpack.c.b16 %v1258, %v1253
    %v1579 = vpack.c.b16 %v1259, %v1254
    %v1580 = vpack.c.b16 %v1260, %v1255
    %v1581 = vpack.c.b16 %v1266, %v1261
    %v1582 = vpack.c.b16 %v1267, %v1262
    %v1583 = vpack.c.b16 %v1268, %v1263
    %v1584 = vpack.c.b16 %v1269, %v1264
    %v1585 = vpack.c.b16 %v1270, %v1265
    %v1586 = vpack.c.b16 %v1276, %v1271
    %v1587 = vpack.c.b16 %v1277, %v1272
    %v1588 = vpack.c.b16 %v1278, %v1273
    %v1589 = vpack.c.b16 %v1279, %v1274
    %v1590 = vpack.c.b16 %v1280, %v1275
    %v1591 = vpack.c.b16 %v1286, %v1281
    %v1592 = vpack.c.b16 %v1287, %v1282
    %v1593 = vpack.c.b16 %v1288, %v1283
    %v1594 = vpack.c.b16 %v1289, %v1284
    %v1595 = vpack.c.b16 %v1290, %v1285
    %v1596 = vpack.c.b16 %v1296, %v1291
    %v1597 = vpack.c.b16 %v1297, %v1292
    %v1598 = vpack.c.b16 %v1298, %v1293
    %v1599 = vpack.c.b16 %v1299, %v1294
    %v1600 = vpack.c.b16 %v1300, %v1295
    %v1601 = vpack.c.b16 %v1306, %v1301
    %v1602 = vpack.c.b16 %v1307, %v1302
    %v1603 = vpack.c.b16 %v1308, %v1303
    %v1604 = vpack.c.b16 %v1309, %v1304
    %v1605 = vpack.c.b16 %v1310, %v1305
    %v1606 = vpack.c.b16 %v1316, %v1311
    %v1607 = vpack.c.b16 %v1317, %v1312
    %v1608 = vpack.c.b16 %v1318, %v1313
    %v1609 = vpack.c.b16 %v1319, %v1314
    %v1610 = vpack.c.b16 %v1320, %v1315
    %v1611 = vpack.c.b16 %v1326, %v1321
    %v1612 = vpack.c.b16 %v1327, %v1322
    %v1613 = vpack.c.b16 %v1328, %v1323
    %v1614 = vpack.c.b16 %v1329, %v1324
    %v1615 = vpack.c.b16 %v1330, %v1325
    %v1616 = vpack.c.b16 %v1336, %v1331
    %v1617 = vpack.c.b16 %v1337, %v1332
    %v1618 = vpack.c.b16 %v1338, %v1333
    %v1619 = vpack.c.b16 %v1339, %v1334
    %v1620 = vpack.c.b16 %v1340, %v1335
    %v1621 = vpack.c.b16 %v1346, %v1341
    %v1622 = vpack.c.b16 %v1347, %v1342
    %v1623 = vpack.c.b16 %v1348, %v1343
    %v1624 = vpack.c.b16 %v1349, %v1344
    %v1625 = vpack.c.b16 %v1350, %v1345
    %v1626 = vpack.c.b16 %v1356, %v1351
    %v1627 = vpack.c.b16 %v1357, %v1352
    %v1628 = vpack.c.b16 %v1358, %v1353
    %v1629 = vpack.c.b16 %v1359, %v1354
    %v1630 = vpack.c.b16 %v1360, %v1355
    %v1631 = vpack.c.b16 %v1366, %v1361
    %v1632 = vpack.c.b16 %v1367, %v1362
    %v1633 = vpack.c.b16 %v1368, %v1363
    %v1634 = vpack.c.b16 %v1369, %v1364
    %v1635 = vpack.c.b16 %v1370, %v1365
    %v1636 = vpack.c.b16 %v1376, %v1371
    %v1637 = vpack.c.b16 %v1377, %v1372
    %v1638 = vpack.c.b16 %v1378, %v1373
    %v1639 = vpack.c.b16 %v1379, %v1374
    %v1640 = vpack.c.b16 %v1380, %v1375
    %v1641 = vpack.c.b16 %v1386, %v1381
    %v1642 = vpack.c.b16 %v1387, %v1382
    %v1643 = vpack.c.b16 %v1388, %v1383
    %v1644 = vpack.c.b16 %v1389, %v1384
    %v1645 = vpack.c.b16 %v1390, %v1385
    %v1646 = vpack.c.b16 %v1396, %v1391
    %v1647 = vpack.c.b16 %v1397, %v1392
    %v1648 = vpack.c.b16 %v1398, %v1393
    %v1649 = vpack.c.b16 %v1399, %v1394
    %v1650 = vpack.c.b16 %v1400, %v1395
    %vm1901 = vcmask 261120
    %v1903 = vsel %vm1901, %v288, 0
    %1905 = vmatpush.bf16.msra.mxu0 %v1436
    %1906 = vmatpush.bf16.msra.mxu0 %v1431
    %1907 = vmatpush.bf16.msra.mxu0 %v1426
    %1908 = vmatpush.bf16.msra.mxu0 %v1421
    %1909 = vmatpush.bf16.msra.mxu0 %v1416
    %1910 = vmatpush.bf16.msra.mxu0 %v1411
    %1911 = vmatpush.bf16.msra.mxu0 %v1406
    %1912 = vmatpush.bf16.msra.mxu0 %v1401
    %1913 = vmatmul.bf16.gmra.mxu0 %v282
    %v1914 = vpop.f32.mrf.mxu0
    %v1915 = vadd.f32 %v591, %v1914
    %v1916 = vpop.f32.mrf.mxu0
    %1917 = vdwg.mxu0
    %1918 = vmatpush.bf16.msra.mxu0 %v1476
    %1919 = vmatpush.bf16.msra.mxu0 %v1471
    %1920 = vmatpush.bf16.msra.mxu0 %v1466
    %1921 = vmatpush.bf16.msra.mxu0 %v1461
    %1922 = vmatpush.bf16.msra.mxu0 %v1456
    %1923 = vmatpush.bf16.msra.mxu0 %v1451
    %1924 = vmatpush.bf16.msra.mxu0 %v1446
    %1925 = vmatpush.bf16.msra.mxu0 %v1441
    %1926 = vmatmul.bf16.gmra.mxu0 %v283
    %v1927 = vpop.f32.mrf.mxu0
    %v1928 = vadd.f32 %v1915, %v1927
    %v1929 = vpop.f32.mrf.mxu0
    %1930 = vdwg.mxu0
    %1931 = vmatpush.bf16.msra.mxu0 %v1516
    %1932 = vmatpush.bf16.msra.mxu0 %v1511
    %1933 = vmatpush.bf16.msra.mxu0 %v1506
    %1934 = vmatpush.bf16.msra.mxu0 %v1501
    %1935 = vmatpush.bf16.msra.mxu0 %v1496
    %1936 = vmatpush.bf16.msra.mxu0 %v1491
    %1937 = vmatpush.bf16.msra.mxu0 %v1486
    %1938 = vmatpush.bf16.msra.mxu0 %v1481
    %1939 = vmatmul.bf16.gmra.mxu0 %v284
    %v1940 = vpop.f32.mrf.mxu0
    %v1941 = vadd.f32 %v1928, %v1940
    %v1942 = vpop.f32.mrf.mxu0
    %1943 = vdwg.mxu0
    %1944 = vmatpush.bf16.msra.mxu0 %v1556
    %1945 = vmatpush.bf16.msra.mxu0 %v1551
    %1946 = vmatpush.bf16.msra.mxu0 %v1546
    %1947 = vmatpush.bf16.msra.mxu0 %v1541
    %1948 = vmatpush.bf16.msra.mxu0 %v1536
    %1949 = vmatpush.bf16.msra.mxu0 %v1531
    %1950 = vmatpush.bf16.msra.mxu0 %v1526
    %1951 = vmatpush.bf16.msra.mxu0 %v1521
    %1952 = vmatmul.bf16.gmra.mxu0 %v285
    %v1953 = vpop.f32.mrf.mxu0
    %v1954 = vadd.f32 %v1941, %v1953
    %v1955 = vpop.f32.mrf.mxu0
    %1956 = vdwg.mxu0
    %1957 = vmatpush.bf16.msra.mxu0 %v1596
    %1958 = vmatpush.bf16.msra.mxu0 %v1591
    %1959 = vmatpush.bf16.msra.mxu0 %v1586
    %1960 = vmatpush.bf16.msra.mxu0 %v1581
    %1961 = vmatpush.bf16.msra.mxu0 %v1576
    %1962 = vmatpush.bf16.msra.mxu0 %v1571
    %1963 = vmatpush.bf16.msra.mxu0 %v1566
    %1964 = vmatpush.bf16.msra.mxu0 %v1561
    %1965 = vmatmul.bf16.gmra.mxu0 %v286
    %v1966 = vpop.f32.mrf.mxu0
    %v1967 = vadd.f32 %v1954, %v1966
    %v1968 = vpop.f32.mrf.mxu0
    %1969 = vdwg.mxu0
    %1970 = vmatpush.bf16.msra.mxu0 %v1636
    %1971 = vmatpush.bf16.msra.mxu0 %v1631
    %1972 = vmatpush.bf16.msra.mxu0 %v1626
    %1973 = vmatpush.bf16.msra.mxu0 %v1621
    %1974 = vmatpush.bf16.msra.mxu0 %v1616
    %1975 = vmatpush.bf16.msra.mxu0 %v1611
    %1976 = vmatpush.bf16.msra.mxu0 %v1606
    %1977 = vmatpush.bf16.msra.mxu0 %v1601
    %1978 = vmatmul.bf16.gmra.mxu0 %v287
    %v1979 = vpop.f32.mrf.mxu0
    %v1980 = vadd.f32 %v1967, %v1979
    %v1981 = vpop.f32.mrf.mxu0
    %1982 = vdwg.mxu0
    %1983 = vmatpush.bf16.msra.mxu0 0
    %1984 = vmatpush.bf16.msra.mxu0 0
    %1985 = vmatpush.bf16.msra.mxu0 0
    %1986 = vmatpush.bf16.msra.mxu0 0
    %1987 = vmatpush.bf16.msra.mxu0 0
    %1988 = vmatpush.bf16.msra.mxu0 0
    %1989 = vmatpush.bf16.msra.mxu0 %v1646
    %1990 = vmatpush.bf16.msra.mxu0 %v1641
    %1991 = vmatmul.bf16.gmra.mxu0 %v1903
    %v1992 = vpop.f32.mrf.mxu0
    %v1993 = vadd.f32 %v1980, %v1992
    %v1994 = vpop.f32.mrf.mxu0
    %1995 = vdwg.mxu0
    %1996 = vmatpush.bf16.msra.mxu0 %v1437
    %1997 = vmatpush.bf16.msra.mxu0 %v1432
    %1998 = vmatpush.bf16.msra.mxu0 %v1427
    %1999 = vmatpush.bf16.msra.mxu0 %v1422
    %2000 = vmatpush.bf16.msra.mxu0 %v1417
    %2001 = vmatpush.bf16.msra.mxu0 %v1412
    %2002 = vmatpush.bf16.msra.mxu0 %v1407
    %2003 = vmatpush.bf16.msra.mxu0 %v1402
    %2004 = vmatmul.bf16.gmra.mxu0 %v282
    %v2005 = vpop.f32.mrf.mxu0
    %v2006 = vadd.f32 %v592, %v2005
    %v2007 = vpop.f32.mrf.mxu0
    %2008 = vdwg.mxu0
    %2009 = vmatpush.bf16.msra.mxu0 %v1477
    %2010 = vmatpush.bf16.msra.mxu0 %v1472
    %2011 = vmatpush.bf16.msra.mxu0 %v1467
    %2012 = vmatpush.bf16.msra.mxu0 %v1462
    %2013 = vmatpush.bf16.msra.mxu0 %v1457
    %2014 = vmatpush.bf16.msra.mxu0 %v1452
    %2015 = vmatpush.bf16.msra.mxu0 %v1447
    %2016 = vmatpush.bf16.msra.mxu0 %v1442
    %2017 = vmatmul.bf16.gmra.mxu0 %v283
    %v2018 = vpop.f32.mrf.mxu0
    %v2019 = vadd.f32 %v2006, %v2018
    %v2020 = vpop.f32.mrf.mxu0
    %2021 = vdwg.mxu0
    %2022 = vmatpush.bf16.msra.mxu0 %v1517
    %2023 = vmatpush.bf16.msra.mxu0 %v1512
    %2024 = vmatpush.bf16.msra.mxu0 %v1507
    %2025 = vmatpush.bf16.msra.mxu0 %v1502
    %2026 = vmatpush.bf16.msra.mxu0 %v1497
    %2027 = vmatpush.bf16.msra.mxu0 %v1492
    %2028 = vmatpush.bf16.msra.mxu0 %v1487
    %2029 = vmatpush.bf16.msra.mxu0 %v1482
    %2030 = vmatmul.bf16.gmra.mxu0 %v284
    %v2031 = vpop.f32.mrf.mxu0
    %v2032 = vadd.f32 %v2019, %v2031
    %v2033 = vpop.f32.mrf.mxu0
    %2034 = vdwg.mxu0
    %2035 = vmatpush.bf16.msra.mxu0 %v1557
    %2036 = vmatpush.bf16.msra.mxu0 %v1552
    %2037 = vmatpush.bf16.msra.mxu0 %v1547
    %2038 = vmatpush.bf16.msra.mxu0 %v1542
    %2039 = vmatpush.bf16.msra.mxu0 %v1537
    %2040 = vmatpush.bf16.msra.mxu0 %v1532
    %2041 = vmatpush.bf16.msra.mxu0 %v1527
    %2042 = vmatpush.bf16.msra.mxu0 %v1522
    %2043 = vmatmul.bf16.gmra.mxu0 %v285
    %v2044 = vpop.f32.mrf.mxu0
    %v2045 = vadd.f32 %v2032, %v2044
    %v2046 = vpop.f32.mrf.mxu0
    %2047 = vdwg.mxu0
    %2048 = vmatpush.bf16.msra.mxu0 %v1597
    %2049 = vmatpush.bf16.msra.mxu0 %v1592
    %2050 = vmatpush.bf16.msra.mxu0 %v1587
    %2051 = vmatpush.bf16.msra.mxu0 %v1582
    %2052 = vmatpush.bf16.msra.mxu0 %v1577
    %2053 = vmatpush.bf16.msra.mxu0 %v1572
    %2054 = vmatpush.bf16.msra.mxu0 %v1567
    %2055 = vmatpush.bf16.msra.mxu0 %v1562
    %2056 = vmatmul.bf16.gmra.mxu0 %v286
    %v2057 = vpop.f32.mrf.mxu0
    %v2058 = vadd.f32 %v2045, %v2057
    %v2059 = vpop.f32.mrf.mxu0
    %2060 = vdwg.mxu0
    %2061 = vmatpush.bf16.msra.mxu0 %v1637
    %2062 = vmatpush.bf16.msra.mxu0 %v1632
    %2063 = vmatpush.bf16.msra.mxu0 %v1627
    %2064 = vmatpush.bf16.msra.mxu0 %v1622
    %2065 = vmatpush.bf16.msra.mxu0 %v1617
    %2066 = vmatpush.bf16.msra.mxu0 %v1612
    %2067 = vmatpush.bf16.msra.mxu0 %v1607
    %2068 = vmatpush.bf16.msra.mxu0 %v1602
    %2069 = vmatmul.bf16.gmra.mxu0 %v287
    %v2070 = vpop.f32.mrf.mxu0
    %v2071 = vadd.f32 %v2058, %v2070
    %v2072 = vpop.f32.mrf.mxu0
    %2073 = vdwg.mxu0
    %2074 = vmatpush.bf16.msra.mxu0 0
    %2075 = vmatpush.bf16.msra.mxu0 0
    %2076 = vmatpush.bf16.msra.mxu0 0
    %2077 = vmatpush.bf16.msra.mxu0 0
    %2078 = vmatpush.bf16.msra.mxu0 0
    %2079 = vmatpush.bf16.msra.mxu0 0
    %2080 = vmatpush.bf16.msra.mxu0 %v1647
    %2081 = vmatpush.bf16.msra.mxu0 %v1642
    %2082 = vmatmul.bf16.gmra.mxu0 %v1903
    %v2083 = vpop.f32.mrf.mxu0
    %v2084 = vadd.f32 %v2071, %v2083
    %v2085 = vpop.f32.mrf.mxu0
    %2086 = vdwg.mxu0
    %2087 = vmatpush.bf16.msra.mxu0 %v1438
    %2088 = vmatpush.bf16.msra.mxu0 %v1433
    %2089 = vmatpush.bf16.msra.mxu0 %v1428
    %2090 = vmatpush.bf16.msra.mxu0 %v1423
    %2091 = vmatpush.bf16.msra.mxu0 %v1418
    %2092 = vmatpush.bf16.msra.mxu0 %v1413
    %2093 = vmatpush.bf16.msra.mxu0 %v1408
    %2094 = vmatpush.bf16.msra.mxu0 %v1403
    %2095 = vmatmul.bf16.gmra.mxu0 %v282
    %v2096 = vpop.f32.mrf.mxu0
    %v2097 = vadd.f32 %v593, %v2096
    %v2098 = vpop.f32.mrf.mxu0
    %2099 = vdwg.mxu0
    %2100 = vmatpush.bf16.msra.mxu0 %v1478
    %2101 = vmatpush.bf16.msra.mxu0 %v1473
    %2102 = vmatpush.bf16.msra.mxu0 %v1468
    %2103 = vmatpush.bf16.msra.mxu0 %v1463
    %2104 = vmatpush.bf16.msra.mxu0 %v1458
    %2105 = vmatpush.bf16.msra.mxu0 %v1453
    %2106 = vmatpush.bf16.msra.mxu0 %v1448
    %2107 = vmatpush.bf16.msra.mxu0 %v1443
    %2108 = vmatmul.bf16.gmra.mxu0 %v283
    %v2109 = vpop.f32.mrf.mxu0
    %v2110 = vadd.f32 %v2097, %v2109
    %v2111 = vpop.f32.mrf.mxu0
    %2112 = vdwg.mxu0
    %2113 = vmatpush.bf16.msra.mxu0 %v1518
    %2114 = vmatpush.bf16.msra.mxu0 %v1513
    %2115 = vmatpush.bf16.msra.mxu0 %v1508
    %2116 = vmatpush.bf16.msra.mxu0 %v1503
    %2117 = vmatpush.bf16.msra.mxu0 %v1498
    %2118 = vmatpush.bf16.msra.mxu0 %v1493
    %2119 = vmatpush.bf16.msra.mxu0 %v1488
    %2120 = vmatpush.bf16.msra.mxu0 %v1483
    %2121 = vmatmul.bf16.gmra.mxu0 %v284
    %v2122 = vpop.f32.mrf.mxu0
    %v2123 = vadd.f32 %v2110, %v2122
    %v2124 = vpop.f32.mrf.mxu0
    %2125 = vdwg.mxu0
    %2126 = vmatpush.bf16.msra.mxu0 %v1558
    %2127 = vmatpush.bf16.msra.mxu0 %v1553
    %2128 = vmatpush.bf16.msra.mxu0 %v1548
    %2129 = vmatpush.bf16.msra.mxu0 %v1543
    %2130 = vmatpush.bf16.msra.mxu0 %v1538
    %2131 = vmatpush.bf16.msra.mxu0 %v1533
    %2132 = vmatpush.bf16.msra.mxu0 %v1528
    %2133 = vmatpush.bf16.msra.mxu0 %v1523
    %2134 = vmatmul.bf16.gmra.mxu0 %v285
    %v2135 = vpop.f32.mrf.mxu0
    %v2136 = vadd.f32 %v2123, %v2135
    %v2137 = vpop.f32.mrf.mxu0
    %2138 = vdwg.mxu0
    %2139 = vmatpush.bf16.msra.mxu0 %v1598
    %2140 = vmatpush.bf16.msra.mxu0 %v1593
    %2141 = vmatpush.bf16.msra.mxu0 %v1588
    %2142 = vmatpush.bf16.msra.mxu0 %v1583
    %2143 = vmatpush.bf16.msra.mxu0 %v1578
    %2144 = vmatpush.bf16.msra.mxu0 %v1573
    %2145 = vmatpush.bf16.msra.mxu0 %v1568
    %2146 = vmatpush.bf16.msra.mxu0 %v1563
    %2147 = vmatmul.bf16.gmra.mxu0 %v286
    %v2148 = vpop.f32.mrf.mxu0
    %v2149 = vadd.f32 %v2136, %v2148
    %v2150 = vpop.f32.mrf.mxu0
    %2151 = vdwg.mxu0
    %2152 = vmatpush.bf16.msra.mxu0 %v1638
    %2153 = vmatpush.bf16.msra.mxu0 %v1633
    %2154 = vmatpush.bf16.msra.mxu0 %v1628
    %2155 = vmatpush.bf16.msra.mxu0 %v1623
    %2156 = vmatpush.bf16.msra.mxu0 %v1618
    %2157 = vmatpush.bf16.msra.mxu0 %v1613
    %2158 = vmatpush.bf16.msra.mxu0 %v1608
    %2159 = vmatpush.bf16.msra.mxu0 %v1603
    %2160 = vmatmul.bf16.gmra.mxu0 %v287
    %v2161 = vpop.f32.mrf.mxu0
    %v2162 = vadd.f32 %v2149, %v2161
    %v2163 = vpop.f32.mrf.mxu0
    %2164 = vdwg.mxu0
    %2165 = vmatpush.bf16.msra.mxu0 0
    %2166 = vmatpush.bf16.msra.mxu0 0
    %2167 = vmatpush.bf16.msra.mxu0 0
    %2168 = vmatpush.bf16.msra.mxu0 0
    %2169 = vmatpush.bf16.msra.mxu0 0
    %2170 = vmatpush.bf16.msra.mxu0 0
    %2171 = vmatpush.bf16.msra.mxu0 %v1648
    %2172 = vmatpush.bf16.msra.mxu0 %v1643
    %2173 = vmatmul.bf16.gmra.mxu0 %v1903
    %v2174 = vpop.f32.mrf.mxu0
    %v2175 = vadd.f32 %v2162, %v2174
    %v2176 = vpop.f32.mrf.mxu0
    %2177 = vdwg.mxu0
    %2178 = vmatpush.bf16.msra.mxu0 %v1439
    %2179 = vmatpush.bf16.msra.mxu0 %v1434
    %2180 = vmatpush.bf16.msra.mxu0 %v1429
    %2181 = vmatpush.bf16.msra.mxu0 %v1424
    %2182 = vmatpush.bf16.msra.mxu0 %v1419
    %2183 = vmatpush.bf16.msra.mxu0 %v1414
    %2184 = vmatpush.bf16.msra.mxu0 %v1409
    %2185 = vmatpush.bf16.msra.mxu0 %v1404
    %2186 = vmatmul.bf16.gmra.mxu0 %v282
    %v2187 = vpop.f32.mrf.mxu0
    %v2188 = vadd.f32 %v594, %v2187
    %v2189 = vpop.f32.mrf.mxu0
    %2190 = vdwg.mxu0
    %2191 = vmatpush.bf16.msra.mxu0 %v1479
    %2192 = vmatpush.bf16.msra.mxu0 %v1474
    %2193 = vmatpush.bf16.msra.mxu0 %v1469
    %2194 = vmatpush.bf16.msra.mxu0 %v1464
    %2195 = vmatpush.bf16.msra.mxu0 %v1459
    %2196 = vmatpush.bf16.msra.mxu0 %v1454
    %2197 = vmatpush.bf16.msra.mxu0 %v1449
    %2198 = vmatpush.bf16.msra.mxu0 %v1444
    %2199 = vmatmul.bf16.gmra.mxu0 %v283
    %v2200 = vpop.f32.mrf.mxu0
    %v2201 = vadd.f32 %v2188, %v2200
    %v2202 = vpop.f32.mrf.mxu0
    %2203 = vdwg.mxu0
    %2204 = vmatpush.bf16.msra.mxu0 %v1519
    %2205 = vmatpush.bf16.msra.mxu0 %v1514
    %2206 = vmatpush.bf16.msra.mxu0 %v1509
    %2207 = vmatpush.bf16.msra.mxu0 %v1504
    %2208 = vmatpush.bf16.msra.mxu0 %v1499
    %2209 = vmatpush.bf16.msra.mxu0 %v1494
    %2210 = vmatpush.bf16.msra.mxu0 %v1489
    %2211 = vmatpush.bf16.msra.mxu0 %v1484
    %2212 = vmatmul.bf16.gmra.mxu0 %v284
    %v2213 = vpop.f32.mrf.mxu0
    %v2214 = vadd.f32 %v2201, %v2213
    %v2215 = vpop.f32.mrf.mxu0
    %2216 = vdwg.mxu0
    %2217 = vmatpush.bf16.msra.mxu0 %v1559
    %2218 = vmatpush.bf16.msra.mxu0 %v1554
    %2219 = vmatpush.bf16.msra.mxu0 %v1549
    %2220 = vmatpush.bf16.msra.mxu0 %v1544
    %2221 = vmatpush.bf16.msra.mxu0 %v1539
    %2222 = vmatpush.bf16.msra.mxu0 %v1534
    %2223 = vmatpush.bf16.msra.mxu0 %v1529
    %2224 = vmatpush.bf16.msra.mxu0 %v1524
    %2225 = vmatmul.bf16.gmra.mxu0 %v285
    %v2226 = vpop.f32.mrf.mxu0
    %v2227 = vadd.f32 %v2214, %v2226
    %v2228 = vpop.f32.mrf.mxu0
    %2229 = vdwg.mxu0
    %2230 = vmatpush.bf16.msra.mxu0 %v1599
    %2231 = vmatpush.bf16.msra.mxu0 %v1594
    %2232 = vmatpush.bf16.msra.mxu0 %v1589
    %2233 = vmatpush.bf16.msra.mxu0 %v1584
    %2234 = vmatpush.bf16.msra.mxu0 %v1579
    %2235 = vmatpush.bf16.msra.mxu0 %v1574
    %2236 = vmatpush.bf16.msra.mxu0 %v1569
    %2237 = vmatpush.bf16.msra.mxu0 %v1564
    %2238 = vmatmul.bf16.gmra.mxu0 %v286
    %v2239 = vpop.f32.mrf.mxu0
    %v2240 = vadd.f32 %v2227, %v2239
    %v2241 = vpop.f32.mrf.mxu0
    %2242 = vdwg.mxu0
    %2243 = vmatpush.bf16.msra.mxu0 %v1639
    %2244 = vmatpush.bf16.msra.mxu0 %v1634
    %2245 = vmatpush.bf16.msra.mxu0 %v1629
    %2246 = vmatpush.bf16.msra.mxu0 %v1624
    %2247 = vmatpush.bf16.msra.mxu0 %v1619
    %2248 = vmatpush.bf16.msra.mxu0 %v1614
    %2249 = vmatpush.bf16.msra.mxu0 %v1609
    %2250 = vmatpush.bf16.msra.mxu0 %v1604
    %2251 = vmatmul.bf16.gmra.mxu0 %v287
    %v2252 = vpop.f32.mrf.mxu0
    %v2253 = vadd.f32 %v2240, %v2252
    %v2254 = vpop.f32.mrf.mxu0
    %2255 = vdwg.mxu0
    %2256 = vmatpush.bf16.msra.mxu0 0
    %2257 = vmatpush.bf16.msra.mxu0 0
    %2258 = vmatpush.bf16.msra.mxu0 0
    %2259 = vmatpush.bf16.msra.mxu0 0
    %2260 = vmatpush.bf16.msra.mxu0 0
    %2261 = vmatpush.bf16.msra.mxu0 0
    %2262 = vmatpush.bf16.msra.mxu0 %v1649
    %2263 = vmatpush.bf16.msra.mxu0 %v1644
    %2264 = vmatmul.bf16.gmra.mxu0 %v1903
    %v2265 = vpop.f32.mrf.mxu0
    %v2266 = vadd.f32 %v2253, %v2265
    %v2267 = vpop.f32.mrf.mxu0
    %2268 = vdwg.mxu0
    %2269 = vmatpush.bf16.msra.mxu0 %v1440
    %2270 = vmatpush.bf16.msra.mxu0 %v1435
    %2271 = vmatpush.bf16.msra.mxu0 %v1430
    %2272 = vmatpush.bf16.msra.mxu0 %v1425
    %2273 = vmatpush.bf16.msra.mxu0 %v1420
    %2274 = vmatpush.bf16.msra.mxu0 %v1415
    %2275 = vmatpush.bf16.msra.mxu0 %v1410
    %2276 = vmatpush.bf16.msra.mxu0 %v1405
    %2277 = vmatmul.bf16.gmra.mxu0 %v282
    %v2278 = vpop.f32.mrf.mxu0
    %v2279 = vadd.f32 %v595, %v2278
    %v2280 = vpop.f32.mrf.mxu0
    %2281 = vdwg.mxu0
    %2282 = vmatpush.bf16.msra.mxu0 %v1480
    %2283 = vmatpush.bf16.msra.mxu0 %v1475
    %2284 = vmatpush.bf16.msra.mxu0 %v1470
    %2285 = vmatpush.bf16.msra.mxu0 %v1465
    %2286 = vmatpush.bf16.msra.mxu0 %v1460
    %2287 = vmatpush.bf16.msra.mxu0 %v1455
    %2288 = vmatpush.bf16.msra.mxu0 %v1450
    %2289 = vmatpush.bf16.msra.mxu0 %v1445
    %2290 = vmatmul.bf16.gmra.mxu0 %v283
    %v2291 = vpop.f32.mrf.mxu0
    %v2292 = vadd.f32 %v2279, %v2291
    %v2293 = vpop.f32.mrf.mxu0
    %2294 = vdwg.mxu0
    %2295 = vmatpush.bf16.msra.mxu0 %v1520
    %2296 = vmatpush.bf16.msra.mxu0 %v1515
    %2297 = vmatpush.bf16.msra.mxu0 %v1510
    %2298 = vmatpush.bf16.msra.mxu0 %v1505
    %2299 = vmatpush.bf16.msra.mxu0 %v1500
    %2300 = vmatpush.bf16.msra.mxu0 %v1495
    %2301 = vmatpush.bf16.msra.mxu0 %v1490
    %2302 = vmatpush.bf16.msra.mxu0 %v1485
    %2303 = vmatmul.bf16.gmra.mxu0 %v284
    %v2304 = vpop.f32.mrf.mxu0
    %v2305 = vadd.f32 %v2292, %v2304
    %v2306 = vpop.f32.mrf.mxu0
    %2307 = vdwg.mxu0
    %2308 = vmatpush.bf16.msra.mxu0 %v1560
    %2309 = vmatpush.bf16.msra.mxu0 %v1555
    %2310 = vmatpush.bf16.msra.mxu0 %v1550
    %2311 = vmatpush.bf16.msra.mxu0 %v1545
    %2312 = vmatpush.bf16.msra.mxu0 %v1540
    %2313 = vmatpush.bf16.msra.mxu0 %v1535
    %2314 = vmatpush.bf16.msra.mxu0 %v1530
    %2315 = vmatpush.bf16.msra.mxu0 %v1525
    %2316 = vmatmul.bf16.gmra.mxu0 %v285
    %v2317 = vpop.f32.mrf.mxu0
    %v2318 = vadd.f32 %v2305, %v2317
    %v2319 = vpop.f32.mrf.mxu0
    %2320 = vdwg.mxu0
    %2321 = vmatpush.bf16.msra.mxu0 %v1600
    %2322 = vmatpush.bf16.msra.mxu0 %v1595
    %2323 = vmatpush.bf16.msra.mxu0 %v1590
    %2324 = vmatpush.bf16.msra.mxu0 %v1585
    %2325 = vmatpush.bf16.msra.mxu0 %v1580
    %2326 = vmatpush.bf16.msra.mxu0 %v1575
    %2327 = vmatpush.bf16.msra.mxu0 %v1570
    %2328 = vmatpush.bf16.msra.mxu0 %v1565
    %2329 = vmatmul.bf16.gmra.mxu0 %v286
    %v2330 = vpop.f32.mrf.mxu0
    %v2331 = vadd.f32 %v2318, %v2330
    %v2332 = vpop.f32.mrf.mxu0
    %2333 = vdwg.mxu0
    %2334 = vmatpush.bf16.msra.mxu0 %v1640
    %2335 = vmatpush.bf16.msra.mxu0 %v1635
    %2336 = vmatpush.bf16.msra.mxu0 %v1630
    %2337 = vmatpush.bf16.msra.mxu0 %v1625
    %2338 = vmatpush.bf16.msra.mxu0 %v1620
    %2339 = vmatpush.bf16.msra.mxu0 %v1615
    %2340 = vmatpush.bf16.msra.mxu0 %v1610
    %2341 = vmatpush.bf16.msra.mxu0 %v1605
    %2342 = vmatmul.bf16.gmra.mxu0 %v287
    %v2343 = vpop.f32.mrf.mxu0
    %v2344 = vadd.f32 %v2331, %v2343
    %v2345 = vpop.f32.mrf.mxu0
    %2346 = vdwg.mxu0
    %2347 = vmatpush.bf16.msra.mxu0 0
    %2348 = vmatpush.bf16.msra.mxu0 0
    %2349 = vmatpush.bf16.msra.mxu0 0
    %2350 = vmatpush.bf16.msra.mxu0 0
    %2351 = vmatpush.bf16.msra.mxu0 0
    %2352 = vmatpush.bf16.msra.mxu0 0
    %2353 = vmatpush.bf16.msra.mxu0 %v1650
    %2354 = vmatpush.bf16.msra.mxu0 %v1645
    %2355 = vmatmul.bf16.gmra.mxu0 %v1903
    %v2356 = vpop.f32.mrf.mxu0
    %v2357 = vadd.f32 %v2344, %v2356
    %v2358 = vpop.f32.mrf.mxu0
    %2359 = vdwg.mxu0
    %v2360 = vmax.f32 %v1993, 0.0
    %v2361 = vmax.f32 %v2084, 0.0
    %v2362 = vmax.f32 %v2175, 0.0
    %v2363 = vmax.f32 %v2266, 0.0
    %v2364 = vmax.f32 %v2357, 0.0
    %v2365 = vpack.c.bf16 %v2360, %v2360
    %v2366 = vpack.c.bf16 %v2361, %v2361
    %v2367 = vpack.c.bf16 %v2362, %v2362
    %v2368 = vpack.c.bf16 %v2363, %v2363
    %v2369 = vpack.c.bf16 %v2364, %v2364
    %v2370 = vld [vmem:[#allocation6] sm:$0xf]
    %v2371 = vld [vmem:[#allocation6 + $0x4] sm:$0xf]
    %v2372 = vld [vmem:[#allocation6 + $0x8] sm:$0xf]
    %v2373 = vld [vmem:[#allocation6 + $0xc] sm:$0xf]
    %v2374 = vld [vmem:[#allocation6 + $0x10] sm:$0xf]
    %v2375 = vld [vmem:[#allocation6 + $0x14] sm:$0xf]
    %v2376 = vld [vmem:[#allocation6 + $0x18] sm:$0xf]
    %v2377 = vld [vmem:[#allocation6 + $0x1c] sm:$0xf]
    %v2378 = vld [vmem:[#allocation6 + $0x20] sm:$0xf]
    %v2379 = vld [vmem:[#allocation6 + $0x24] sm:$0xf]
    %v2380 = vld [vmem:[#allocation6 + $0x28] sm:$0xf]
    %v2381 = vld [vmem:[#allocation6 + $0x2c] sm:$0xf]
    %v2382 = vld [vmem:[#allocation6 + $0x30] sm:$0xf]
    %v2383 = vld [vmem:[#allocation6 + $0x34] sm:$0xf]
    %v2384 = vld [vmem:[#allocation6 + $0x38] sm:$0xf]
    %v2385 = vld [vmem:[#allocation6 + $0x3c] sm:$0xf]
    %v2386 = vld [vmem:[#allocation6 + $0x40] sm:$0xf]
    %v2387 = vld [vmem:[#allocation6 + $0x44] sm:$0xf]
    %v2388 = vld [vmem:[#allocation6 + $0x48] sm:$0xf]
    %v2389 = vld [vmem:[#allocation6 + $0x4c] sm:$0xf]
    %v2390 = vld [vmem:[#allocation6 + $0x50] sm:$0xf]
    %v2391 = vld [vmem:[#allocation6 + $0x54] sm:$0xf]
    %v2392 = vld [vmem:[#allocation6 + $0x58] sm:$0xf]
    %v2393 = vld [vmem:[#allocation6 + $0x5c] sm:$0xf]
    %v2394 = vld [vmem:[#allocation6 + $0x60] sm:$0xf]
    %v2395 = vld [vmem:[#allocation6 + $0x64] sm:$0xf]
    %v2396 = vld [vmem:[#allocation6 + $0x68] sm:$0xf]
    %v2397 = vld [vmem:[#allocation6 + $0x6c] sm:$0xf]
    %v2398 = vld [vmem:[#allocation6 + $0x70] sm:$0xf]
    %v2399 = vld [vmem:[#allocation6 + $0x74] sm:$0xf]
    %v2400 = vld [vmem:[#allocation6 + $0x78] sm:$0xf]
    %v2401 = vld [vmem:[#allocation6 + $0x7c] sm:$0xf]
    %v2402 = vld [vmem:[#allocation6 + $0x80] sm:$0xf]
    %v2403 = vld [vmem:[#allocation6 + $0x84] sm:$0xf]
    %v2404 = vld [vmem:[#allocation6 + $0x88] sm:$0xf]
    %v2405 = vld [vmem:[#allocation6 + $0x8c] sm:$0xf]
    %v2406 = vld [vmem:[#allocation6 + $0x90] sm:$0xf]
    %v2407 = vld [vmem:[#allocation6 + $0x94] sm:$0xf]
    %v2408 = vld [vmem:[#allocation6 + $0x98] sm:$0xf]
    %v2409 = vld [vmem:[#allocation6 + $0x9c] sm:$0xf]
    %v2410 = vld [vmem:[#allocation6 + $0xa0] sm:$0xf]
    %v2411 = vld [vmem:[#allocation6 + $0xa4] sm:$0xf]
    %v2412 = vld [vmem:[#allocation6 + $0xa8] sm:$0xf]
    %v2413 = vld [vmem:[#allocation6 + $0xac] sm:$0xf]
    %v2414 = vld [vmem:[#allocation6 + $0xb0] sm:$0xf]
    %v2415 = vld [vmem:[#allocation6 + $0xb4] sm:$0xf]
    %v2416 = vld [vmem:[#allocation6 + $0xb8] sm:$0xf]
    %v2417 = vld [vmem:[#allocation6 + $0xbc] sm:$0xf]
    %v2418 = vld [vmem:[#allocation6 + $0xc0] sm:$0xf]
    %v2419 = vld [vmem:[#allocation6 + $0xc4] sm:$0xf]
    %v2420 = vld [vmem:[#allocation6 + $0xc8] sm:$0xf]
    %v2421 = vld [vmem:[#allocation6 + $0xcc] sm:$0xf]
    %v2422 = vld [vmem:[#allocation6 + $0xd0] sm:$0xf]
    %v2423 = vld [vmem:[#allocation6 + $0xd4] sm:$0xf]
    %v2424 = vld [vmem:[#allocation6 + $0xd8] sm:$0xf]
    %v2425 = vld [vmem:[#allocation6 + $0xdc] sm:$0xf]
    %v2426 = vld [vmem:[#allocation6 + $0xe0] sm:$0xf]
    %v2427 = vld [vmem:[#allocation6 + $0xe4] sm:$0xf]
    %v2428 = vld [vmem:[#allocation6 + $0xe8] sm:$0xf]
    %v2429 = vld [vmem:[#allocation6 + $0xec] sm:$0xf]
    %v2430 = vld [vmem:[#allocation6 + $0xf0] sm:$0xf]
    %v2431 = vld [vmem:[#allocation6 + $0xf4] sm:$0xf]
    %v2432 = vld [vmem:[#allocation6 + $0xf8] sm:$0xf]
    %v2433 = vld [vmem:[#allocation6 + $0xfc] sm:$0xf]
    %v2434 = vld [vmem:[#allocation6 + $0x100] sm:$0xf]
    %v2435 = vld [vmem:[#allocation6 + $0x104] sm:$0xf]
    %v2436 = vld [vmem:[#allocation6 + $0x108] sm:$0xf]
    %v2437 = vld [vmem:[#allocation6 + $0x10c] sm:$0xf]
    %v2438 = vld [vmem:[#allocation6 + $0x110] sm:$0xf]
    %v2439 = vld [vmem:[#allocation6 + $0x114] sm:$0xf]
    %v2440 = vld [vmem:[#allocation6 + $0x118] sm:$0xf]
    %v2441 = vld [vmem:[#allocation6 + $0x11c] sm:$0xf]
    %v2442 = vld [vmem:[#allocation6 + $0x120] sm:$0xf]
    %v2443 = vld [vmem:[#allocation6 + $0x124] sm:$0xf]
    %v2444 = vld [vmem:[#allocation6 + $0x128] sm:$0xf]
    %v2445 = vld [vmem:[%s6] sm:$0x1]
    %v2447 = vperm.slane %v2445, 0
    %v2524 = vunpack.c.l.b16 %v2370
    %v2525 = vunpack.c.l.b16 %v2371
    %v2526 = vunpack.c.l.b16 %v2372
    %v2527 = vunpack.c.l.b16 %v2373
    %v2528 = vunpack.c.l.b16 %v2374
    %v2529 = vunpack.c.l.b16 %v2375
    %v2530 = vunpack.c.l.b16 %v2376
    %v2531 = vunpack.c.l.b16 %v2377
    %v2532 = vunpack.c.l.b16 %v2378
    %v2533 = vunpack.c.l.b16 %v2379
    %v2534 = vunpack.c.l.b16 %v2380
    %v2535 = vunpack.c.l.b16 %v2381
    %v2536 = vunpack.c.l.b16 %v2382
    %v2537 = vunpack.c.l.b16 %v2383
    %v2538 = vunpack.c.l.b16 %v2384
    %v2539 = vunpack.c.l.b16 %v2385
    %v2540 = vunpack.c.l.b16 %v2386
    %v2541 = vunpack.c.l.b16 %v2387
    %v2542 = vunpack.c.l.b16 %v2388
    %v2543 = vunpack.c.l.b16 %v2389
    %v2544 = vunpack.c.l.b16 %v2390
    %v2545 = vunpack.c.l.b16 %v2391
    %v2546 = vunpack.c.l.b16 %v2392
    %v2547 = vunpack.c.l.b16 %v2393
    %v2548 = vunpack.c.l.b16 %v2394
    %v2549 = vunpack.c.l.b16 %v2395
    %v2550 = vunpack.c.l.b16 %v2396
    %v2551 = vunpack.c.l.b16 %v2397
    %v2552 = vunpack.c.l.b16 %v2398
    %v2553 = vunpack.c.l.b16 %v2399
    %v2554 = vunpack.c.l.b16 %v2400
    %v2555 = vunpack.c.l.b16 %v2401
    %v2556 = vunpack.c.l.b16 %v2402
    %v2557 = vunpack.c.l.b16 %v2403
    %v2558 = vunpack.c.l.b16 %v2404
    %v2559 = vunpack.c.l.b16 %v2405
    %v2560 = vunpack.c.l.b16 %v2406
    %v2561 = vunpack.c.l.b16 %v2407
    %v2562 = vunpack.c.l.b16 %v2408
    %v2563 = vunpack.c.l.b16 %v2409
    %v2564 = vunpack.c.l.b16 %v2410
    %v2565 = vunpack.c.l.b16 %v2411
    %v2566 = vunpack.c.l.b16 %v2412
    %v2567 = vunpack.c.l.b16 %v2413
    %v2568 = vunpack.c.l.b16 %v2414
    %v2569 = vunpack.c.l.b16 %v2415
    %v2570 = vunpack.c.l.b16 %v2416
    %v2571 = vunpack.c.l.b16 %v2417
    %v2572 = vunpack.c.l.b16 %v2418
    %v2573 = vunpack.c.l.b16 %v2419
    %v2574 = vunpack.c.l.b16 %v2420
    %v2575 = vunpack.c.l.b16 %v2421
    %v2576 = vunpack.c.l.b16 %v2422
    %v2577 = vunpack.c.l.b16 %v2423
    %v2578 = vunpack.c.l.b16 %v2424
    %v2579 = vunpack.c.l.b16 %v2425
    %v2580 = vunpack.c.l.b16 %v2426
    %v2581 = vunpack.c.l.b16 %v2427
    %v2582 = vunpack.c.l.b16 %v2428
    %v2583 = vunpack.c.l.b16 %v2429
    %v2584 = vunpack.c.l.b16 %v2430
    %v2585 = vunpack.c.l.b16 %v2431
    %v2586 = vunpack.c.l.b16 %v2432
    %v2587 = vunpack.c.l.b16 %v2433
    %v2588 = vunpack.c.l.b16 %v2434
    %v2589 = vunpack.c.l.b16 %v2435
    %v2590 = vunpack.c.l.b16 %v2436
    %v2591 = vunpack.c.l.b16 %v2437
    %v2592 = vunpack.c.l.b16 %v2438
    %v2593 = vunpack.c.l.b16 %v2439
    %v2594 = vunpack.c.l.b16 %v2440
    %v2595 = vunpack.c.l.b16 %v2441
    %v2596 = vunpack.c.l.b16 %v2442
    %v2597 = vunpack.c.l.b16 %v2443
    %v2598 = vunpack.c.l.b16 %v2444
    %v2599 = vpack.c.b16 %v2525, %v2524
    %v2600 = vpack.c.b16 %v2527, %v2526
    %v2601 = vpack.c.b16 %v2529, %v2528
    %v2602 = vpack.c.b16 %v2531, %v2530
    %v2603 = vpack.c.b16 %v2533, %v2532
    %v2604 = vpack.c.b16 %v2535, %v2534
    %v2605 = vpack.c.b16 %v2537, %v2536
    %v2606 = vpack.c.b16 %v2539, %v2538
    %v2607 = vpack.c.b16 %v2541, %v2540
    %v2608 = vpack.c.b16 %v2543, %v2542
    %v2609 = vpack.c.b16 %v2545, %v2544
    %v2610 = vpack.c.b16 %v2547, %v2546
    %v2611 = vpack.c.b16 %v2549, %v2548
    %v2612 = vpack.c.b16 %v2551, %v2550
    %v2613 = vpack.c.b16 %v2553, %v2552
    %v2614 = vpack.c.b16 %v2555, %v2554
    %v2615 = vpack.c.b16 %v2557, %v2556
    %v2616 = vpack.c.b16 %v2559, %v2558
    %v2617 = vpack.c.b16 %v2561, %v2560
    %v2618 = vpack.c.b16 %v2563, %v2562
    %v2619 = vpack.c.b16 %v2565, %v2564
    %v2620 = vpack.c.b16 %v2567, %v2566
    %v2621 = vpack.c.b16 %v2569, %v2568
    %v2622 = vpack.c.b16 %v2571, %v2570
    %v2623 = vpack.c.b16 %v2573, %v2572
    %v2624 = vpack.c.b16 %v2575, %v2574
    %v2625 = vpack.c.b16 %v2577, %v2576
    %v2626 = vpack.c.b16 %v2579, %v2578
    %v2627 = vpack.c.b16 %v2581, %v2580
    %v2628 = vpack.c.b16 %v2583, %v2582
    %v2629 = vpack.c.b16 %v2585, %v2584
    %v2630 = vpack.c.b16 %v2587, %v2586
    %v2631 = vpack.c.b16 %v2589, %v2588
    %v2632 = vpack.c.b16 %v2591, %v2590
    %v2633 = vpack.c.b16 %v2593, %v2592
    %v2634 = vpack.c.b16 %v2595, %v2594
    %v2635 = vpack.c.b16 %v2597, %v2596
    %v2636 = vpack.c.b16 %v2598, %v2598
    %vm2674 = vcmask 719872
    %v2676 = vsel %vm2674, %v2369, 0
    %v2679 = vsel %vm162, %v2636, 0
    %2681 = vmatpush.bf16.msra.mxu0 %v2606
    %2682 = vmatpush.bf16.msra.mxu0 %v2605
    %2683 = vmatpush.bf16.msra.mxu0 %v2604
    %2684 = vmatpush.bf16.msra.mxu0 %v2603
    %2685 = vmatpush.bf16.msra.mxu0 %v2602
    %2686 = vmatpush.bf16.msra.mxu0 %v2601
    %2687 = vmatpush.bf16.msra.mxu0 %v2600
    %2688 = vmatpush.bf16.msra.mxu0 %v2599
    %2689 = vmatmul.bf16.gmra.mxu0 %v2365
    %v2690 = vpop.f32.mrf.mxu0
    %v2691 = vadd.f32 %v2447, %v2690
    %v2692 = vpop.f32.mrf.mxu0
    %2693 = vdwg.mxu0
    %2694 = vmatpush.bf16.msra.mxu0 %v2614
    %2695 = vmatpush.bf16.msra.mxu0 %v2613
    %2696 = vmatpush.bf16.msra.mxu0 %v2612
    %2697 = vmatpush.bf16.msra.mxu0 %v2611
    %2698 = vmatpush.bf16.msra.mxu0 %v2610
    %2699 = vmatpush.bf16.msra.mxu0 %v2609
    %2700 = vmatpush.bf16.msra.mxu0 %v2608
    %2701 = vmatpush.bf16.msra.mxu0 %v2607
    %2702 = vmatmul.bf16.gmra.mxu0 %v2366
    %v2703 = vpop.f32.mrf.mxu0
    %v2704 = vadd.f32 %v2691, %v2703
    %v2705 = vpop.f32.mrf.mxu0
    %2706 = vdwg.mxu0
    %2707 = vmatpush.bf16.msra.mxu0 %v2622
    %2708 = vmatpush.bf16.msra.mxu0 %v2621
    %2709 = vmatpush.bf16.msra.mxu0 %v2620
    %2710 = vmatpush.bf16.msra.mxu0 %v2619
    %2711 = vmatpush.bf16.msra.mxu0 %v2618
    %2712 = vmatpush.bf16.msra.mxu0 %v2617
    %2713 = vmatpush.bf16.msra.mxu0 %v2616
    %2714 = vmatpush.bf16.msra.mxu0 %v2615
    %2715 = vmatmul.bf16.gmra.mxu0 %v2367
    %v2716 = vpop.f32.mrf.mxu0
    %v2717 = vadd.f32 %v2704, %v2716
    %v2718 = vpop.f32.mrf.mxu0
    %2719 = vdwg.mxu0
    %2720 = vmatpush.bf16.msra.mxu0 %v2630
    %2721 = vmatpush.bf16.msra.mxu0 %v2629
    %2722 = vmatpush.bf16.msra.mxu0 %v2628
    %2723 = vmatpush.bf16.msra.mxu0 %v2627
    %2724 = vmatpush.bf16.msra.mxu0 %v2626
    %2725 = vmatpush.bf16.msra.mxu0 %v2625
    %2726 = vmatpush.bf16.msra.mxu0 %v2624
    %2727 = vmatpush.bf16.msra.mxu0 %v2623
    %2728 = vmatmul.bf16.gmra.mxu0 %v2368
    %v2729 = vpop.f32.mrf.mxu0
    %v2730 = vadd.f32 %v2717, %v2729
    %v2731 = vpop.f32.mrf.mxu0
    %2732 = vdwg.mxu0
    %2733 = vmatpush.bf16.msra.mxu0 0
    %2734 = vmatpush.bf16.msra.mxu0 0
    %2735 = vmatpush.bf16.msra.mxu0 %v2679
    %2736 = vmatpush.bf16.msra.mxu0 %v2635
    %2737 = vmatpush.bf16.msra.mxu0 %v2634
    %2738 = vmatpush.bf16.msra.mxu0 %v2633
    %2739 = vmatpush.bf16.msra.mxu0 %v2632
    %2740 = vmatpush.bf16.msra.mxu0 %v2631
    %2741 = vmatmul.bf16.gmra.mxu0 %v2676
    %v2742 = vpop.f32.mrf.mxu0
    %v2743 = vadd.f32 %v2730, %v2742
    %v2744 = vpop.f32.mrf.mxu0
    %2745 = vdwg.mxu0
    %v2746 = vtanh.pop %v2743
    %2747 = vst [vmem:[%s7] sm:$0xff] %v2746
    // Predicated region
    $region42: #{actor_forward.1} parent=1 // pred_check
      _
    $region43: #{actor_forward.1} parent=1 // pred_check_branch
      %2749 = sbr.rel (0) target = $region45
    $region44: #{actor_forward.1} parent=1 // pred_region
      _
    $region45: #{actor_forward.1} parent=1 // pred_fallthru
      _
    // Predicated region
    $region46: #{actor_forward.1} parent=1 // pred_check
      _
    $region47: #{actor_forward.1} parent=1 // pred_check_branch
      %2751 = sbr.rel (0) target = $region49
    $region48: #{actor_forward.1} parent=1 // pred_region
      _
    $region49: #{actor_forward.1} parent=1 // pred_fallthru
      _
    %2752 = vsyncpa [#allocation3], 1
    %2753 = vsyncpa [#allocation5], 1

</llo_original>
